<compile_context>
chip_gen: v7x
topology: tpu7x:2x2x1
jax: 0.10.0
libtpu: 0.0.40
codegen_flags: <defaults>
</compile_context>

<pallas_src>
import jax
import jax.numpy as jnp
import numpy as np
from jax.experimental import pallas as pl
from jax.experimental.pallas import tpu as pltpu


def dwt_kernel(g_ref, x_ref, o_ref):
    # g_ref: (4, 2W, W2)      constant Haar / de-interleave matrices (LL,HL,LH,HH)
    # x_ref: (1, TC, H2, 2W)  super rows: [even row | odd row] of each row pair
    # o_ref: (1, 4, TC, H2, W2)
    _, tc, h2, w2x4 = x_ref.shape
    w2 = o_ref.shape[-1]

    v = x_ref[0].astype(jnp.float32)          # (TC, H2, 2W), f32 compute
    v2 = v.reshape(tc * h2, w2x4)             # merge leading dims (lane dim kept)

    for s in range(4):                        # LL, HL, LH, HH (unrolled at trace)
        sub = jnp.dot(
            v2, g_ref[s],
            preferred_element_type=jnp.float32,
            precision=jax.lax.Precision.HIGHEST,
        )                                      # (TC*H2, W2), exact (+-0.5/0 weights)
        o_ref[0, s] = sub.reshape(tc, h2, w2).astype(o_ref.dtype)


def _round_up(a, b):
    return -(-a // b) * b


def _pick_tc(N, C, H2, W2, itemsize, budget_bytes=4 * 1024 * 1024):
    """Channels per block: largest divisor of C whose double-buffered,
    lane-padded VMEM footprint stays within budget (safe for v5e's 16 MiB
    default scoped VMEM as well as v6e/v7x)."""
    in_b = _round_up(H2, 8) * _round_up(4 * W2, 128) * itemsize
    out_b = 4 * _round_up(H2, 8) * _round_up(W2, 128) * itemsize
    per_c = 2 * (in_b + out_b)                # x2: double buffering
    tc = max(1, min(C, budget_bytes // per_c))
    if N == 1 and C >= 2:                     # keep >= 2 grid steps (v7x has 2 TCs)
        tc = min(tc, C // 2)
    while C % tc:
        tc -= 1
    return tc


def _haar_matrices(W2):
    """(4, 4*W2, W2) f32 matrices mapping a length-4*W2 super row
    [even input row | odd input row] to the W2-wide LL/HL/LH/HH output rows."""
    W = 2 * W2
    r = np.arange(2 * W)[:, None]             # source index inside the super row
    j = np.arange(W2)[None, :]                # output column
    row_par = r // W                          # 0: even input row, 1: odd input row
    col = r % W
    col_par = col % 2                         # 0: even input col, 1: odd input col
    match = (col // 2) == j
    h = np.float32(0.5)
    g_ll = np.where(match, h, 0.0)
    g_hl = np.where(match, np.where(col_par == 1, h, -h), 0.0)
    g_lh = np.where(match, np.where(row_par == 1, h, -h), 0.0)
    g_hh = np.where(match, np.where(row_par == col_par, h, -h), 0.0)
    return jnp.asarray(np.stack([g_ll, g_hl, g_lh, g_hh]), dtype=jnp.float32)


def dwt_pallas(x):
    """x: (N, C, H, W) -> (N, 4*C, H//2, W//2), matching torch dwt_init."""
    N, C, H, W = x.shape
    assert H % 2 == 0 and W % 2 == 0
    H2, W2 = H // 2, W // 2
    TC = _pick_tc(N, C, H2, W2, x.dtype.itemsize)

    # Free views only -- no extra HBM traffic outside the kernel.
    xv = x.reshape(N, C, H2, 2 * W)           # super rows: [row 2i | row 2i+1]
    g = _haar_matrices(W2)                    # (4, 2W, W2), tiny constant

    out = pl.pallas_call(
        dwt_kernel,
        out_shape=jax.ShapeDtypeStruct((N, 4, C, H2, W2), x.dtype),
        grid_spec=pltpu.PrefetchScalarGridSpec(
            num_scalar_prefetch=0,
            grid=(N, C // TC),
            in_specs=[
                pl.BlockSpec((4, 2 * W, W2), lambda n, c: (0, 0, 0)),
                pl.BlockSpec((1, TC, H2, 2 * W), lambda n, c: (n, c, 0, 0)),
            ],
            out_specs=pl.BlockSpec((1, 4, TC, H2, W2),
                                   lambda n, c: (n, 0, c, 0, 0)),
        ),
        compiler_params=pltpu.CompilerParams(
            dimension_semantics=("parallel", "parallel")),
    )(g, xv)

    # (N, 4, C, H2, W2) -> (N, 4C, H2, W2) is a pure view; channel order is
    # [LL(0..C-1), HL, LH, HH], identical to torch.cat((LL,HL,LH,HH), 1).
    return out.reshape(N, 4 * C, H2, W2)


def dwt_ref(x):
    """Pure-JAX reference mirroring the PyTorch dwt_init."""
    x01 = x[:, :, 0::2, :] / 2
    x02 = x[:, :, 1::2, :] / 2
    x1 = x01[:, :, :, 0::2]
    x2 = x02[:, :, :, 0::2]
    x3 = x01[:, :, :, 1::2]
    x4 = x02[:, :, :, 1::2]
    x_LL = x1 + x2 + x3 + x4
    x_HL = -x1 - x2 + x3 + x4
    x_LH = -x1 + x2 - x3 + x4
    x_HH = x1 - x2 - x3 + x4
    return jnp.concatenate((x_LL, x_HL, x_LH, x_HH), axis=1)


if __name__ == "__main__":
    key = jax.random.PRNGKey(0)
    x = jax.random.normal(key, (2, 4, 16, 16), dtype=jnp.float32)

    out = dwt_pallas(x)
    out = jax.block_until_ready(out)

    ref = dwt_ref(x)
    assert out.shape == (2, 16, 8, 8), out.shape
    assert jnp.allclose(out, ref, atol=1e-5, rtol=1e-5), (
        float(jnp.max(jnp.abs(out - ref))))

    print("KERNEL_OK")
</pallas_src>

<mosaic_0001>
module attributes {stable_mosaic.version = 11 : i64} {
  func.func @dwt_kernel(%arg0: i32, %arg1: i32, %arg2: memref<4x32x8xf32, #tpu.memory_space<vmem>>, %arg3: memref<1x4x8x32xf32, #tpu.memory_space<vmem>>, %arg4: memref<1x4x4x8x8xf32, #tpu.memory_space<vmem>>) attributes {dimension_semantics = [#tpu.dimension_semantics<parallel>, #tpu.dimension_semantics<parallel>], iteration_bounds = array<i64: 2, 1>, scalar_prefetch = 0 : i64, scratch_operands = 0 : i64, tpu.core_type = #tpu.core_type<tc>, window_params = [{pipeline_mode = #tpu.pipeline_mode<synchronous>, transform_indices = @transform_0, window_bounds = array<i64: 4, 32, 8>}, {transform_indices = @transform_1, window_bounds = array<i64: 1, 4, 8, 32>}, {transform_indices = @transform_2, window_bounds = array<i64: 1, 4, 4, 8, 8>}]} {
    %c0 = arith.constant 0 : index
    %c0_0 = arith.constant 0 : index
    %c0_1 = arith.constant 0 : index
    %c0_2 = arith.constant 0 : index
    %0 = vector.load %arg3[%c0, %c0_0, %c0_1, %c0_2] : memref<1x4x8x32xf32, #tpu.memory_space<vmem>>, vector<1x4x8x32xf32>
    %1 = vector.shape_cast %0 : vector<1x4x8x32xf32> to vector<4x8x32xf32>
    %2 = vector.shape_cast %1 : vector<4x8x32xf32> to vector<32x32xf32>
    %c0_3 = arith.constant 0 : index
    %c0_4 = arith.constant 0 : index
    %c0_5 = arith.constant 0 : index
    %3 = vector.load %arg2[%c0_3, %c0_4, %c0_5] : memref<4x32x8xf32, #tpu.memory_space<vmem>>, vector<1x32x8xf32>
    %4 = vector.shape_cast %3 : vector<1x32x8xf32> to vector<32x8xf32>
    %cst = arith.constant dense<0.000000e+00> : vector<32x8xf32>
    %5 = tpu.matmul %2, %4, %cst {dimension_numbers = #tpu.dot_dimension_numbers<[1], [0], [0], [1], [0, 0, 1, 1], [], []>, precision = #tpu.contract_precision<fp32>} : vector<32x32xf32>, vector<32x8xf32>, vector<32x8xf32> -> vector<32x8xf32>
    %6 = vector.shape_cast %5 : vector<32x8xf32> to vector<4x8x8xf32>
    %c0_6 = arith.constant 0 : index
    %c0_7 = arith.constant 0 : index
    %c0_8 = arith.constant 0 : index
    %c0_9 = arith.constant 0 : index
    %c0_10 = arith.constant 0 : index
    %7 = vector.load %arg4[%c0_6, %c0_7, %c0_8, %c0_9, %c0_10] : memref<1x4x4x8x8xf32, #tpu.memory_space<vmem>>, vector<1x1x4x8x8xf32>
    %8 = vector.shape_cast %7 : vector<1x1x4x8x8xf32> to vector<4x8x8xf32>
    %9 = vector.shape_cast %6 : vector<4x8x8xf32> to vector<1x1x4x8x8xf32>
    tpu.vector_store %arg4[%c0_6, %c0_7, %c0_8, %c0_9, %c0_10], %9 {strides = array<i32>} : memref<1x4x4x8x8xf32, #tpu.memory_space<vmem>>, vector<1x1x4x8x8xf32>,
    %c1 = arith.constant 1 : index
    %c0_11 = arith.constant 0 : index
    %c0_12 = arith.constant 0 : index
    %10 = vector.load %arg2[%c1, %c0_11, %c0_12] : memref<4x32x8xf32, #tpu.memory_space<vmem>>, vector<1x32x8xf32>
    %11 = vector.shape_cast %10 : vector<1x32x8xf32> to vector<32x8xf32>
    %cst_13 = arith.constant dense<0.000000e+00> : vector<32x8xf32>
    %12 = tpu.matmul %2, %11, %cst_13 {dimension_numbers = #tpu.dot_dimension_numbers<[1], [0], [0], [1], [0, 0, 1, 1], [], []>, precision = #tpu.contract_precision<fp32>} : vector<32x32xf32>, vector<32x8xf32>, vector<32x8xf32> -> vector<32x8xf32>
    %13 = vector.shape_cast %12 : vector<32x8xf32> to vector<4x8x8xf32>
    %c0_14 = arith.constant 0 : index
    %c1_15 = arith.constant 1 : index
    %c0_16 = arith.constant 0 : index
    %c0_17 = arith.constant 0 : index
    %c0_18 = arith.constant 0 : index
    %14 = vector.load %arg4[%c0_14, %c1_15, %c0_16, %c0_17, %c0_18] : memref<1x4x4x8x8xf32, #tpu.memory_space<vmem>>, vector<1x1x4x8x8xf32>
    %15 = vector.shape_cast %14 : vector<1x1x4x8x8xf32> to vector<4x8x8xf32>
    %16 = vector.shape_cast %13 : vector<4x8x8xf32> to vector<1x1x4x8x8xf32>
    tpu.vector_store %arg4[%c0_14, %c1_15, %c0_16, %c0_17, %c0_18], %16 {strides = array<i32>} : memref<1x4x4x8x8xf32, #tpu.memory_space<vmem>>, vector<1x1x4x8x8xf32>,
    %c2 = arith.constant 2 : index
    %c0_19 = arith.constant 0 : index
    %c0_20 = arith.constant 0 : index
    %17 = vector.load %arg2[%c2, %c0_19, %c0_20] : memref<4x32x8xf32, #tpu.memory_space<vmem>>, vector<1x32x8xf32>
    %18 = vector.shape_cast %17 : vector<1x32x8xf32> to vector<32x8xf32>
    %cst_21 = arith.constant dense<0.000000e+00> : vector<32x8xf32>
    %19 = tpu.matmul %2, %18, %cst_21 {dimension_numbers = #tpu.dot_dimension_numbers<[1], [0], [0], [1], [0, 0, 1, 1], [], []>, precision = #tpu.contract_precision<fp32>} : vector<32x32xf32>, vector<32x8xf32>, vector<32x8xf32> -> vector<32x8xf32>
    %20 = vector.shape_cast %19 : vector<32x8xf32> to vector<4x8x8xf32>
    %c0_22 = arith.constant 0 : index
    %c2_23 = arith.constant 2 : index
    %c0_24 = arith.constant 0 : index
    %c0_25 = arith.constant 0 : index
    %c0_26 = arith.constant 0 : index
    %21 = vector.load %arg4[%c0_22, %c2_23, %c0_24, %c0_25, %c0_26] : memref<1x4x4x8x8xf32, #tpu.memory_space<vmem>>, vector<1x1x4x8x8xf32>
    %22 = vector.shape_cast %21 : vector<1x1x4x8x8xf32> to vector<4x8x8xf32>
    %23 = vector.shape_cast %20 : vector<4x8x8xf32> to vector<1x1x4x8x8xf32>
    tpu.vector_store %arg4[%c0_22, %c2_23, %c0_24, %c0_25, %c0_26], %23 {strides = array<i32>} : memref<1x4x4x8x8xf32, #tpu.memory_space<vmem>>, vector<1x1x4x8x8xf32>,
    %c3 = arith.constant 3 : index
    %c0_27 = arith.constant 0 : index
    %c0_28 = arith.constant 0 : index
    %24 = vector.load %arg2[%c3, %c0_27, %c0_28] : memref<4x32x8xf32, #tpu.memory_space<vmem>>, vector<1x32x8xf32>
    %25 = vector.shape_cast %24 : vector<1x32x8xf32> to vector<32x8xf32>
    %cst_29 = arith.constant dense<0.000000e+00> : vector<32x8xf32>
    %26 = tpu.matmul %2, %25, %cst_29 {dimension_numbers = #tpu.dot_dimension_numbers<[1], [0], [0], [1], [0, 0, 1, 1], [], []>, precision = #tpu.contract_precision<fp32>} : vector<32x32xf32>, vector<32x8xf32>, vector<32x8xf32> -> vector<32x8xf32>
    %27 = vector.shape_cast %26 : vector<32x8xf32> to vector<4x8x8xf32>
    %c0_30 = arith.constant 0 : index
    %c3_31 = arith.constant 3 : index
    %c0_32 = arith.constant 0 : index
    %c0_33 = arith.constant 0 : index
    %c0_34 = arith.constant 0 : index
    %28 = vector.load %arg4[%c0_30, %c3_31, %c0_32, %c0_33, %c0_34] : memref<1x4x4x8x8xf32, #tpu.memory_space<vmem>>, vector<1x1x4x8x8xf32>
    %29 = vector.shape_cast %28 : vector<1x1x4x8x8xf32> to vector<4x8x8xf32>
    %30 = vector.shape_cast %27 : vector<4x8x8xf32> to vector<1x1x4x8x8xf32>
    tpu.vector_store %arg4[%c0_30, %c3_31, %c0_32, %c0_33, %c0_34], %30 {strides = array<i32>} : memref<1x4x4x8x8xf32, #tpu.memory_space<vmem>>, vector<1x1x4x8x8xf32>,
    return
  }
  func.func @transform_0(%arg0: i32, %arg1: i32) -> (i32, i32, i32) {
    %c0_i32 = arith.constant 0 : i32
    %c0_i32_0 = arith.constant 0 : i32
    %c0_i32_1 = arith.constant 0 : i32
    %c0_i32_2 = arith.constant 0 : i32
    return %c0_i32, %c0_i32_0, %c0_i32_1 : i32, i32, i32
  }
  func.func @transform_1(%arg0: i32, %arg1: i32) -> (i32, i32, i32, i32) {
    %c0_i32 = arith.constant 0 : i32
    %c0_i32_0 = arith.constant 0 : i32
    %c0_i32_1 = arith.constant 0 : i32
    return %arg0, %arg1, %c0_i32, %c0_i32_0 : i32, i32, i32, i32
  }
  func.func @transform_2(%arg0: i32, %arg1: i32) -> (i32, i32, i32, i32, i32) {
    %c0_i32 = arith.constant 0 : i32
    %c0_i32_0 = arith.constant 0 : i32
    %c0_i32_1 = arith.constant 0 : i32
    %c0_i32_2 = arith.constant 0 : i32
    return %arg0, %c0_i32, %arg1, %c0_i32_0, %c0_i32_1 : i32, i32, i32, i32, i32
  }
}

</mosaic_0001>

<llo_original>
// kernel: tpu_custom_call.1
$region0: #{tpu_custom_call.1}
  #allocation0 [shape = 'u32[]', space=smem, size = 0x4, offset = 0x4, fixed_abs, tag = 'smem constant byte address 0x4 - core index']
  #allocation1 [shape = 'u32[144,128]{1,0:T(1,128)}', space=vmem, size = 0x12000, scoped, tag = 'internal scratch']
  %s0 = inlined_call_operand.vmem [shape: f32[4,32,8], index: 0, kind: input, shape index: {}]
  %s1 = inlined_call_operand.vmem [shape: f32[2,4,8,32], index: 1, kind: input, shape index: {}]
  %s2 = inlined_call_operand.hbm [shape: f32[2,4,4,8,8], index: 2, kind: output, shape index: {}]
  %s3 = sld [smem:[#allocation0]]
  $region41: #{tpu_custom_call.1} parent=0
    _
  %s5 = ssub.s32 1, %s3
  %s6 = scalar_select 0, %s5, %s3
  $region1: #{tpu_custom_call.1} parent=0
    #allocation2 [shape = 'u8[131072]{0}', space=vmem, size = 0x20000, scoped, tag = 'output window, operand 0']
    #allocation3 [shape = 's32[2]{0}', space=sflag, size = 0x8, scoped, tag = 'scoped memory for tpu_custom_call.1']
    %7 = vsyncpa [#allocation3], 0
    %s8 = scalar_lea.sflag [#allocation3], 1
    %9 = vsyncpa %s8, 0
    loop: start=0, step=1, limit=4
    $region2: #{tpu_custom_call.1} parent=1 // loop_pre_header
      _
    $region3: #{tpu_custom_call.1} parent=1 // loop_header
      %s11 = sphi 0, %s15
      %p12 = scmp.ge.s32.totalorder %s11, 4
      %s18 = sphi 0, %s30
      %s19 = sphi 0, %s26
      %s20 = sphi 0, %s18
      %s21 = sphi 0, %s19
      %s22 = sphi 0, %s20
      %s23 = sphi 0, %s21
      %s31 = sphi 0, %s31
      %s33 = sphi 0, %s31
      %s34 = sphi 0, %s33
      %s48 = sphi 0, %s34
      %s56 = sphi 0, %s58
      %s59 = sphi 0, %s56
      %s60 = sphi 0, %s59
      %s76 = sphi 0, %s60
      %s84 = sphi 0, %s86
      %s87 = sphi 0, %s84
      %s88 = sphi 0, %s87
      %s104 = sphi 0, %s88
    $region4: #{tpu_custom_call.1} parent=1 // loop_header_branch
      %14 = sbr.rel (%p12) target = $region8
    $region5: #{tpu_custom_call.1} parent=1 // loop_body
      %s16 = ssub.s32 %s11, 1
      %s17 = ssub.s32 %s11, 2
      %s24 = sadd.s32 1, %s19
      %p25 = scmp.ge.s32.totalorder %s24, 1
      %s26 = scalar_select %p25, 0, %s24
      %s27 = sadd.s32 1, %s18
      %s28 = scalar_select %p25, %s27, %s18
      %p29 = scmp.ge.s32.totalorder %s28, 2
      %s30 = scalar_select %p29, 0, %s28
      %s32 = sadd.s32 %s31, 1
      %p35 = scmp.eq.s32.totalorder %s11, 1
      %p36 = scmp.ne.s32.totalorder %s31, %s33
      %p37 = scmp.eq.s32.totalorder %s11, 0
      %p38 = por %p36, %p37
      %p39 = scmp.ne.s32.totalorder %s31, %s33
      %p40 = scmp.eq.s32.totalorder %s16, 1
      %p41 = por %p39, %p40
      %p42 = scmp.ne.s32.totalorder %s33, %s34
      %p43 = scmp.eq.s32.totalorder %s16, 0
      %p44 = por %p42, %p43
      %p45 = scmp.ne.s32.totalorder %s33, %s34
      %p46 = scmp.eq.s32.totalorder %s17, 1
      %p47 = por %p45, %p46
      %p49 = scmp.ne.s32.totalorder %s34, %s48
      %p50 = scmp.eq.s32.totalorder %s17, 0
      %p51 = por %p49, %p50
      %s52 = ssub.s32 %s18, %s30
      %s53 = ssub.s32 %s19, %s26
      %s54 = sor.u32 %s52, %s53
      %p55 = scmp.eq.s32.totalorder %s54, 0
      %s57 = sadd.s32 %s56, 1
      %s58 = scalar_select %p55, %s56, %s57
      %p61 = pneg %p55
      %p62 = scmp.eq.s32.totalorder %s11, 1
      %p63 = por %p61, %p62
      %p64 = scmp.ne.s32.totalorder %s56, %s59
      %p65 = scmp.eq.s32.totalorder %s11, 0
      %p66 = por %p64, %p65
      %p67 = scmp.ne.s32.totalorder %s56, %s59
      %p68 = scmp.eq.s32.totalorder %s16, 1
      %p69 = por %p67, %p68
      %p70 = scmp.ne.s32.totalorder %s59, %s60
      %p71 = scmp.eq.s32.totalorder %s16, 0
      %p72 = por %p70, %p71
      %p73 = scmp.ne.s32.totalorder %s59, %s60
      %p74 = scmp.eq.s32.totalorder %s17, 1
      %p75 = por %p73, %p74
      %p77 = scmp.ne.s32.totalorder %s60, %s76
      %p78 = scmp.eq.s32.totalorder %s17, 0
      %p79 = por %p77, %p78
      %s80 = ssub.s32 %s18, %s30
      %s81 = ssub.s32 %s19, %s26
      %s82 = sor.u32 %s80, %s81
      %p83 = scmp.eq.s32.totalorder %s82, 0
      %s85 = sadd.s32 %s84, 1
      %s86 = scalar_select %p83, %s84, %s85
      %p89 = pneg %p83
      %p90 = scmp.eq.s32.totalorder %s11, 1
      %p91 = por %p89, %p90
      %p92 = scmp.ne.s32.totalorder %s84, %s87
      %p93 = scmp.eq.s32.totalorder %s11, 0
      %p94 = por %p92, %p93
      %p95 = scmp.ne.s32.totalorder %s84, %s87
      %p96 = scmp.eq.s32.totalorder %s16, 1
      %p97 = por %p95, %p96
      %p98 = scmp.ne.s32.totalorder %s87, %s88
      %p99 = scmp.eq.s32.totalorder %s16, 0
      %p100 = por %p98, %p99
      %p101 = scmp.ne.s32.totalorder %s87, %s88
      %p102 = scmp.eq.s32.totalorder %s17, 1
      %p103 = por %p101, %p102
      %p105 = scmp.ne.s32.totalorder %s88, %s104
      %p106 = scmp.eq.s32.totalorder %s17, 0
      %p107 = por %p105, %p106
      %p108 = scmp.le.s32.totalorder 1, %s11
      %p109 = scmp.lt.s32.totalorder %s11, 3
      %p110 = pnand %p108, %p109
      %p111 = pneg %p110
      // Predicated region
      $region9: #{tpu_custom_call.1} parent=5 // pred_check
        _
      $region10: #{tpu_custom_call.1} parent=5 // pred_check_branch
        %113 = sbr.rel (%p110) target = $region12
      $region11: #{tpu_custom_call.1} parent=5 // pred_region
        %s114 = ssub.s32 %s11, 1
        // Predicated region
        $region13: #{tpu_custom_call.1} parent=11 // pred_check
          %p115 = pneg %p44
        $region14: #{tpu_custom_call.1} parent=11 // pred_check_branch
          %117 = sbr.rel (%p115) target = $region16
        $region15: #{tpu_custom_call.1} parent=11 // pred_region
          _
        $region16: #{tpu_custom_call.1} parent=11 // pred_fallthru
          _
      $region12: #{tpu_custom_call.1} parent=5 // pred_fallthru
        _
      %p118 = scmp.lt.s32.totalorder %s11, 2
      // Predicated region
      $region17: #{tpu_custom_call.1} parent=5 // pred_check
        %p119 = pneg %p118
      $region18: #{tpu_custom_call.1} parent=5 // pred_check_branch
        %121 = sbr.rel (%p119) target = $region20
      $region19: #{tpu_custom_call.1} parent=5 // pred_region
        // Predicated region
        $region21: #{tpu_custom_call.1} parent=19 // pred_check
          %p122 = pneg %p66
        $region22: #{tpu_custom_call.1} parent=19 // pred_check_branch
          %124 = sbr.rel (%p122) target = $region24
        $region23: #{tpu_custom_call.1} parent=19 // pred_region
          %s125 = smul.u32 4, %s19
          %p126 = scmp.lt.s32.totalorder %s18, 1
          %s127 = scalar_select %p126, %s18, 1
          %p128 = scmp.lt.s32.totalorder %s125, 3
          %s129 = scalar_select %p128, %s125, 3
          %s130 = smul.addr %s127, 4
          %s131 = sadd.s32 %s129, %s130
          %s132 = smul.addr %s131, 8
          %s133 = scalar_lea.vmem %s1, %s132
          %s134 = smul.u32 4, %s19
        $region24: #{tpu_custom_call.1} parent=19 // pred_fallthru
          _
      $region20: #{tpu_custom_call.1} parent=5 // pred_fallthru
        _
      %p135 = scmp.le.s32.totalorder 1, %s11
      %p136 = scmp.lt.s32.totalorder %s11, 3
      %p137 = pnand %p135, %p136
      %p138 = pneg %p137
      // Predicated region
      $region25: #{tpu_custom_call.1} parent=5 // pred_check
        _
      $region26: #{tpu_custom_call.1} parent=5 // pred_check_branch
        %140 = sbr.rel (%p137) target = $region28
      $region27: #{tpu_custom_call.1} parent=5 // pred_region
        %s141 = ssub.s32 %s11, 1
        %p142 = pneg %p44
        %p143 = pneg %p41
        %s144 = smul.u32 4, %s21
        %p145 = scmp.lt.s32.totalorder %s20, 1
        %s146 = scalar_select %p145, %s20, 1
        %p147 = scmp.lt.s32.totalorder %s144, 3
        %s148 = scalar_select %p147, %s144, 3
        %s149 = smul.addr %s146, 4
        %s150 = sadd.s32 %s148, %s149
        %s151 = smul.addr %s150, 8
        %s152 = scalar_lea.vmem %s1, %s151
        %p153 = pneg %p72
        %p154 = pneg %p69
        %p155 = pneg %p100
        %p156 = pneg %p97
        %s157 = sand.u32 %s87, 1
        %s158 = scalar_lea.sflag [#allocation3], %s157
        %s159 = sand.u32 %s87, 1
        %s160 = smul.addr %s159, 128
        %s161 = scalar_lea.vmem [#allocation2], %s160
        %s162 = smul.u32 4, %s21
        %p163 = scmp.lt.s32.totalorder %s20, 1
        %s164 = scalar_select %p163, %s20, 1
        %p165 = scmp.lt.s32.totalorder %s162, 3
        %s166 = scalar_select %p165, %s162, 3
        %s167 = smul.addr %s164, 4
        %s168 = sadd.s32 %s166, %s167
        %s169 = smul.addr %s168, 8
        %s170 = scalar_lea.vmem %s1, %s169
        %s171 = smul.u32 4, %s21
        %s172 = smul.u32 4, %s21
        %v173 = vld [vmem:[%s170] sm:$0xff]
        %v174 = vld [vmem:[%s170 + $0x8] sm:$0xff]
        %v175 = vld [vmem:[%s170 + $0x10] sm:$0xff]
        %v176 = vld [vmem:[%s170 + $0x18] sm:$0xff]
        %v177 = vld [vmem:[%s0] sm:$0xff]
        %v178 = vld [vmem:[%s0 + $0x8] sm:$0xff]
        %v179 = vld [vmem:[%s0 + $0x10] sm:$0xff]
        %v180 = vld [vmem:[%s0 + $0x18] sm:$0xff]
        %vm181 = vcmask 261120
        %v183 = vsel %vm181, %v173, 0
        %v186 = vsel %vm181, %v174, 0
        %v189 = vsel %vm181, %v175, 0
        %v192 = vsel %vm181, %v176, 0
        %194 = vmatprep.subr.mxu0 0.0
        %v195 = vand.u32 %v177, 4294901760
        %196 = vmatpush1.msra.mxu0 %v195
        %197 = vmatprep.subr.mxu0 0.0
        %v198 = vand.u32 %v178, 4294901760
        %199 = vmatpush1.msra.mxu0 %v198
        %200 = vmatprep.subr.mxu0 0.0
        %v201 = vand.u32 %v179, 4294901760
        %202 = vmatpush1.msra.mxu0 %v201
        %203 = vmatprep.subr.mxu0 0.0
        %v204 = vand.u32 %v180, 4294901760
        %205 = vmatpush1.msra.mxu0 %v204
        %206 = vmatprep.subr.mxu0 0.0
        %207 = vmatpush1.msra.mxu0 0.0
        %208 = vmatprep.subr.mxu0 0.0
        %209 = vmatpush1.msra.mxu0 0.0
        %210 = vmatprep.subr.mxu0 0.0
        %211 = vmatpush1.msra.mxu0 0.0
        %212 = vmatprep.subr.mxu0 0.0
        %213 = vmatpush1.msra.mxu0 0.0
        %214 = vmatprep.subr.mxu0 0.0
        %215 = vmatpush1.msra.mxu0 0.0
        %216 = vmatprep.subr.mxu0 0.0
        %217 = vmatpush1.msra.mxu0 0.0
        %218 = vmatprep.subr.mxu0 0.0
        %219 = vmatpush1.msra.mxu0 0.0
        %220 = vmatprep.subr.mxu0 0.0
        %221 = vmatpush1.msra.mxu0 0.0
        %222 = vmatprep.subr.mxu0 0.0
        %223 = vmatpush1.msra.mxu0 0.0
        %224 = vmatprep.subr.mxu0 0.0
        %225 = vmatpush1.msra.mxu0 0.0
        %226 = vmatprep.subr.mxu0 0.0
        %227 = vmatpush1.msra.mxu0 0.0
        %228 = vmatprep.subr.mxu0 0.0
        %229 = vmatpush1.msra.mxu0 0.0
        %230 = vmatprep.subr.mxu0 0.0
        %231 = vmatpush1.msra.mxu0 0.0
        %232 = vmatprep.subr.mxu0 0.0
        %233 = vmatpush1.msra.mxu0 0.0
        %234 = vmatprep.subr.mxu0 0.0
        %235 = vmatpush1.msra.mxu0 0.0
        %236 = vmatprep.subr.mxu0 0.0
        %237 = vmatpush1.msra.mxu0 0.0
        %238 = vmatprep.subr.mxu0 0.0
        %239 = vmatpush1.msra.mxu0 0.0
        %240 = vmatprep.subr.mxu0 0.0
        %241 = vmatpush1.msra.mxu0 0.0
        %242 = vmatprep.subr.mxu0 0.0
        %243 = vmatpush1.msra.mxu0 0.0
        %244 = vmatprep.subr.mxu0 0.0
        %245 = vmatpush1.msra.mxu0 0.0
        %246 = vmatprep.subr.mxu0 0.0
        %247 = vmatpush1.msra.mxu0 0.0
        %248 = vmatprep.subr.mxu0 0.0
        %249 = vmatpush1.msra.mxu0 0.0
        %250 = vmatprep.subr.mxu0 0.0
        %251 = vmatpush1.msra.mxu0 0.0
        %252 = vmatprep.subr.mxu0 0.0
        %253 = vmatpush1.msra.mxu0 0.0
        %254 = vmatprep.subr.mxu0 0.0
        %255 = vmatpush1.msra.mxu0 0.0
        %256 = vmatprep.subr.mxu0 0.0
        %257 = vmatpush1.msra.mxu0 0.0
        %258 = vmatprep.subr.mxu0 0.0
        %259 = vmatpush1.msra.mxu0 0.0
        %260 = vmatprep.subr.mxu0 0.0
        %261 = vmatpush1.msra.mxu0 0.0
        %262 = vmatprep.mubr.f32.mxu0 0.0
        %v263 = vand.u32 %v183, 4294901760
        %v264 = vsub.f32 %v183, %v263
        %v265 = vand.u32 %v264, 4294901760
        %v266 = vsub.f32 %v264, %v265
        %v267 = vand.u32 %v266, 4294901760
        %268 = vmatmul.mubr.f32.gmra.mrb[0].mxu0 %v267
        %v269 = vpop.f32.mrb[0].mxu0
        %v270 = vadd.f32 0.0, %v269
        %v271 = vpop.f32.mrb[0].mxu0
        %272 = vmatprep.mubr.f32.mxu0 0.0
        %v273 = vand.u32 %v186, 4294901760
        %v274 = vsub.f32 %v186, %v273
        %v275 = vand.u32 %v274, 4294901760
        %v276 = vsub.f32 %v274, %v275
        %v277 = vand.u32 %v276, 4294901760
        %278 = vmatmul.mubr.f32.gmra.mrb[0].mxu0 %v277
        %v279 = vpop.f32.mrb[0].mxu0
        %v280 = vadd.f32 0.0, %v279
        %v281 = vpop.f32.mrb[0].mxu0
        %282 = vmatprep.mubr.f32.mxu0 0.0
        %v283 = vand.u32 %v189, 4294901760
        %v284 = vsub.f32 %v189, %v283
        %v285 = vand.u32 %v284, 4294901760
        %v286 = vsub.f32 %v284, %v285
        %v287 = vand.u32 %v286, 4294901760
        %288 = vmatmul.mubr.f32.gmra.mrb[0].mxu0 %v287
        %v289 = vpop.f32.mrb[0].mxu0
        %v290 = vadd.f32 0.0, %v289
        %v291 = vpop.f32.mrb[0].mxu0
        %292 = vmatprep.mubr.f32.mxu0 0.0
        %v293 = vand.u32 %v192, 4294901760
        %v294 = vsub.f32 %v192, %v293
        %v295 = vand.u32 %v294, 4294901760
        %v296 = vsub.f32 %v294, %v295
        %v297 = vand.u32 %v296, 4294901760
        %298 = vmatmul.mubr.f32.gmra.mrb[0].mxu0 %v297
        %v299 = vpop.f32.mrb[0].mxu0
        %v300 = vadd.f32 0.0, %v299
        %v301 = vpop.f32.mrb[0].mxu0
        %302 = vdwg.mxu0
        %303 = vmatprep.subr.mxu0 0.0
        %v304 = vand.u32 %v177, 4294901760
        %v305 = vsub.f32 %v177, %v304
        %v306 = vand.u32 %v305, 4294901760
        %v307 = vsub.f32 %v305, %v306
        %v308 = vand.u32 %v307, 4294901760
        %309 = vmatpush1.msra.mxu0 %v308
        %310 = vmatprep.subr.mxu0 0.0
        %v311 = vand.u32 %v178, 4294901760
        %v312 = vsub.f32 %v178, %v311
        %v313 = vand.u32 %v312, 4294901760
        %v314 = vsub.f32 %v312, %v313
        %v315 = vand.u32 %v314, 4294901760
        %316 = vmatpush1.msra.mxu0 %v315
        %317 = vmatprep.subr.mxu0 0.0
        %v318 = vand.u32 %v179, 4294901760
        %v319 = vsub.f32 %v179, %v318
        %v320 = vand.u32 %v319, 4294901760
        %v321 = vsub.f32 %v319, %v320
        %v322 = vand.u32 %v321, 4294901760
        %323 = vmatpush1.msra.mxu0 %v322
        %324 = vmatprep.subr.mxu0 0.0
        %v325 = vand.u32 %v180, 4294901760
        %v326 = vsub.f32 %v180, %v325
        %v327 = vand.u32 %v326, 4294901760
        %v328 = vsub.f32 %v326, %v327
        %v329 = vand.u32 %v328, 4294901760
        %330 = vmatpush1.msra.mxu0 %v329
        %331 = vmatprep.subr.mxu0 0.0
        %332 = vmatpush1.msra.mxu0 0.0
        %333 = vmatprep.subr.mxu0 0.0
        %334 = vmatpush1.msra.mxu0 0.0
        %335 = vmatprep.subr.mxu0 0.0
        %336 = vmatpush1.msra.mxu0 0.0
        %337 = vmatprep.subr.mxu0 0.0
        %338 = vmatpush1.msra.mxu0 0.0
        %339 = vmatprep.subr.mxu0 0.0
        %340 = vmatpush1.msra.mxu0 0.0
        %341 = vmatprep.subr.mxu0 0.0
        %342 = vmatpush1.msra.mxu0 0.0
        %343 = vmatprep.subr.mxu0 0.0
        %344 = vmatpush1.msra.mxu0 0.0
        %345 = vmatprep.subr.mxu0 0.0
        %346 = vmatpush1.msra.mxu0 0.0
        %347 = vmatprep.subr.mxu0 0.0
        %348 = vmatpush1.msra.mxu0 0.0
        %349 = vmatprep.subr.mxu0 0.0
        %350 = vmatpush1.msra.mxu0 0.0
        %351 = vmatprep.subr.mxu0 0.0
        %352 = vmatpush1.msra.mxu0 0.0
        %353 = vmatprep.subr.mxu0 0.0
        %354 = vmatpush1.msra.mxu0 0.0
        %355 = vmatprep.subr.mxu0 0.0
        %356 = vmatpush1.msra.mxu0 0.0
        %357 = vmatprep.subr.mxu0 0.0
        %358 = vmatpush1.msra.mxu0 0.0
        %359 = vmatprep.subr.mxu0 0.0
        %360 = vmatpush1.msra.mxu0 0.0
        %361 = vmatprep.subr.mxu0 0.0
        %362 = vmatpush1.msra.mxu0 0.0
        %363 = vmatprep.subr.mxu0 0.0
        %364 = vmatpush1.msra.mxu0 0.0
        %365 = vmatprep.subr.mxu0 0.0
        %366 = vmatpush1.msra.mxu0 0.0
        %367 = vmatprep.subr.mxu0 0.0
        %368 = vmatpush1.msra.mxu0 0.0
        %369 = vmatprep.subr.mxu0 0.0
        %370 = vmatpush1.msra.mxu0 0.0
        %371 = vmatprep.subr.mxu0 0.0
        %372 = vmatpush1.msra.mxu0 0.0
        %373 = vmatprep.subr.mxu0 0.0
        %374 = vmatpush1.msra.mxu0 0.0
        %375 = vmatprep.subr.mxu0 0.0
        %376 = vmatpush1.msra.mxu0 0.0
        %377 = vmatprep.subr.mxu0 0.0
        %378 = vmatpush1.msra.mxu0 0.0
        %379 = vmatprep.subr.mxu0 0.0
        %380 = vmatpush1.msra.mxu0 0.0
        %381 = vmatprep.subr.mxu0 0.0
        %382 = vmatpush1.msra.mxu0 0.0
        %383 = vmatprep.subr.mxu0 0.0
        %384 = vmatpush1.msra.mxu0 0.0
        %385 = vmatprep.subr.mxu0 0.0
        %386 = vmatpush1.msra.mxu0 0.0
        %387 = vmatprep.mubr.f32.mxu0 0.0
        %v388 = vand.u32 %v183, 4294901760
        %389 = vmatmul.mubr.f32.gmra.mrb[0].mxu0 %v388
        %v390 = vpop.f32.mrb[0].mxu0
        %v391 = vadd.f32 %v270, %v390
        %v392 = vpop.f32.mrb[0].mxu0
        %393 = vmatprep.mubr.f32.mxu0 0.0
        %v394 = vand.u32 %v186, 4294901760
        %395 = vmatmul.mubr.f32.gmra.mrb[0].mxu0 %v394
        %v396 = vpop.f32.mrb[0].mxu0
        %v397 = vadd.f32 %v280, %v396
        %v398 = vpop.f32.mrb[0].mxu0
        %399 = vmatprep.mubr.f32.mxu0 0.0
        %v400 = vand.u32 %v189, 4294901760
        %401 = vmatmul.mubr.f32.gmra.mrb[0].mxu0 %v400
        %v402 = vpop.f32.mrb[0].mxu0
        %v403 = vadd.f32 %v290, %v402
        %v404 = vpop.f32.mrb[0].mxu0
        %405 = vmatprep.mubr.f32.mxu0 0.0
        %v406 = vand.u32 %v192, 4294901760
        %407 = vmatmul.mubr.f32.gmra.mrb[0].mxu0 %v406
        %v408 = vpop.f32.mrb[0].mxu0
        %v409 = vadd.f32 %v300, %v408
        %v410 = vpop.f32.mrb[0].mxu0
        %411 = vdwg.mxu0
        %412 = vmatprep.subr.mxu0 0.0
        %v413 = vand.u32 %v177, 4294901760
        %v414 = vsub.f32 %v177, %v413
        %415 = vmatpush1.msra.mxu0 %v414
        %416 = vmatprep.subr.mxu0 0.0
        %v417 = vand.u32 %v178, 4294901760
        %v418 = vsub.f32 %v178, %v417
        %419 = vmatpush1.msra.mxu0 %v418
        %420 = vmatprep.subr.mxu0 0.0
        %v421 = vand.u32 %v179, 4294901760
        %v422 = vsub.f32 %v179, %v421
        %423 = vmatpush1.msra.mxu0 %v422
        %424 = vmatprep.subr.mxu0 0.0
        %v425 = vand.u32 %v180, 4294901760
        %v426 = vsub.f32 %v180, %v425
        %427 = vmatpush1.msra.mxu0 %v426
        %428 = vmatprep.subr.mxu0 0.0
        %429 = vmatpush1.msra.mxu0 0.0
        %430 = vmatprep.subr.mxu0 0.0
        %431 = vmatpush1.msra.mxu0 0.0
        %432 = vmatprep.subr.mxu0 0.0
        %433 = vmatpush1.msra.mxu0 0.0
        %434 = vmatprep.subr.mxu0 0.0
        %435 = vmatpush1.msra.mxu0 0.0
        %436 = vmatprep.subr.mxu0 0.0
        %437 = vmatpush1.msra.mxu0 0.0
        %438 = vmatprep.subr.mxu0 0.0
        %439 = vmatpush1.msra.mxu0 0.0
        %440 = vmatprep.subr.mxu0 0.0
        %441 = vmatpush1.msra.mxu0 0.0
        %442 = vmatprep.subr.mxu0 0.0
        %443 = vmatpush1.msra.mxu0 0.0
        %444 = vmatprep.subr.mxu0 0.0
        %445 = vmatpush1.msra.mxu0 0.0
        %446 = vmatprep.subr.mxu0 0.0
        %447 = vmatpush1.msra.mxu0 0.0
        %448 = vmatprep.subr.mxu0 0.0
        %449 = vmatpush1.msra.mxu0 0.0
        %450 = vmatprep.subr.mxu0 0.0
        %451 = vmatpush1.msra.mxu0 0.0
        %452 = vmatprep.subr.mxu0 0.0
        %453 = vmatpush1.msra.mxu0 0.0
        %454 = vmatprep.subr.mxu0 0.0
        %455 = vmatpush1.msra.mxu0 0.0
        %456 = vmatprep.subr.mxu0 0.0
        %457 = vmatpush1.msra.mxu0 0.0
        %458 = vmatprep.subr.mxu0 0.0
        %459 = vmatpush1.msra.mxu0 0.0
        %460 = vmatprep.subr.mxu0 0.0
        %461 = vmatpush1.msra.mxu0 0.0
        %462 = vmatprep.subr.mxu0 0.0
        %463 = vmatpush1.msra.mxu0 0.0
        %464 = vmatprep.subr.mxu0 0.0
        %465 = vmatpush1.msra.mxu0 0.0
        %466 = vmatprep.subr.mxu0 0.0
        %467 = vmatpush1.msra.mxu0 0.0
        %468 = vmatprep.subr.mxu0 0.0
        %469 = vmatpush1.msra.mxu0 0.0
        %470 = vmatprep.subr.mxu0 0.0
        %471 = vmatpush1.msra.mxu0 0.0
        %472 = vmatprep.subr.mxu0 0.0
        %473 = vmatpush1.msra.mxu0 0.0
        %474 = vmatprep.subr.mxu0 0.0
        %475 = vmatpush1.msra.mxu0 0.0
        %476 = vmatprep.subr.mxu0 0.0
        %477 = vmatpush1.msra.mxu0 0.0
        %478 = vmatprep.subr.mxu0 0.0
        %479 = vmatpush1.msra.mxu0 0.0
        %480 = vmatprep.subr.mxu0 0.0
        %481 = vmatpush1.msra.mxu0 0.0
        %482 = vmatprep.subr.mxu0 0.0
        %483 = vmatpush1.msra.mxu0 0.0
        %484 = vmatprep.mubr.f32.mxu0 0.0
        %v485 = vand.u32 %v183, 4294901760
        %v486 = vsub.f32 %v183, %v485
        %487 = vmatmul.mubr.f32.gmra.mrb[0].mxu0 %v486
        %v488 = vpop.f32.mrb[0].mxu0
        %v489 = vadd.f32 %v391, %v488
        %v490 = vpop.f32.mrb[0].mxu0
        %491 = vmatprep.mubr.f32.mxu0 0.0
        %v492 = vand.u32 %v186, 4294901760
        %v493 = vsub.f32 %v186, %v492
        %494 = vmatmul.mubr.f32.gmra.mrb[0].mxu0 %v493
        %v495 = vpop.f32.mrb[0].mxu0
        %v496 = vadd.f32 %v397, %v495
        %v497 = vpop.f32.mrb[0].mxu0
        %498 = vmatprep.mubr.f32.mxu0 0.0
        %v499 = vand.u32 %v189, 4294901760
        %v500 = vsub.f32 %v189, %v499
        %501 = vmatmul.mubr.f32.gmra.mrb[0].mxu0 %v500
        %v502 = vpop.f32.mrb[0].mxu0
        %v503 = vadd.f32 %v403, %v502
        %v504 = vpop.f32.mrb[0].mxu0
        %505 = vmatprep.mubr.f32.mxu0 0.0
        %v506 = vand.u32 %v192, 4294901760
        %v507 = vsub.f32 %v192, %v506
        %508 = vmatmul.mubr.f32.gmra.mrb[0].mxu0 %v507
        %v509 = vpop.f32.mrb[0].mxu0
        %v510 = vadd.f32 %v409, %v509
        %v511 = vpop.f32.mrb[0].mxu0
        %512 = vdwg.mxu0
        %513 = vmatprep.subr.mxu0 0.0
        %v514 = vand.u32 %v177, 4294901760
        %515 = vmatpush1.msra.mxu0 %v514
        %516 = vmatprep.subr.mxu0 0.0
        %v517 = vand.u32 %v178, 4294901760
        %518 = vmatpush1.msra.mxu0 %v517
        %519 = vmatprep.subr.mxu0 0.0
        %v520 = vand.u32 %v179, 4294901760
        %521 = vmatpush1.msra.mxu0 %v520
        %522 = vmatprep.subr.mxu0 0.0
        %v523 = vand.u32 %v180, 4294901760
        %524 = vmatpush1.msra.mxu0 %v523
        %525 = vmatprep.subr.mxu0 0.0
        %526 = vmatpush1.msra.mxu0 0.0
        %527 = vmatprep.subr.mxu0 0.0
        %528 = vmatpush1.msra.mxu0 0.0
        %529 = vmatprep.subr.mxu0 0.0
        %530 = vmatpush1.msra.mxu0 0.0
        %531 = vmatprep.subr.mxu0 0.0
        %532 = vmatpush1.msra.mxu0 0.0
        %533 = vmatprep.subr.mxu0 0.0
        %534 = vmatpush1.msra.mxu0 0.0
        %535 = vmatprep.subr.mxu0 0.0
        %536 = vmatpush1.msra.mxu0 0.0
        %537 = vmatprep.subr.mxu0 0.0
        %538 = vmatpush1.msra.mxu0 0.0
        %539 = vmatprep.subr.mxu0 0.0
        %540 = vmatpush1.msra.mxu0 0.0
        %541 = vmatprep.subr.mxu0 0.0
        %542 = vmatpush1.msra.mxu0 0.0
        %543 = vmatprep.subr.mxu0 0.0
        %544 = vmatpush1.msra.mxu0 0.0
        %545 = vmatprep.subr.mxu0 0.0
        %546 = vmatpush1.msra.mxu0 0.0
        %547 = vmatprep.subr.mxu0 0.0
        %548 = vmatpush1.msra.mxu0 0.0
        %549 = vmatprep.subr.mxu0 0.0
        %550 = vmatpush1.msra.mxu0 0.0
        %551 = vmatprep.subr.mxu0 0.0
        %552 = vmatpush1.msra.mxu0 0.0
        %553 = vmatprep.subr.mxu0 0.0
        %554 = vmatpush1.msra.mxu0 0.0
        %555 = vmatprep.subr.mxu0 0.0
        %556 = vmatpush1.msra.mxu0 0.0
        %557 = vmatprep.subr.mxu0 0.0
        %558 = vmatpush1.msra.mxu0 0.0
        %559 = vmatprep.subr.mxu0 0.0
        %560 = vmatpush1.msra.mxu0 0.0
        %561 = vmatprep.subr.mxu0 0.0
        %562 = vmatpush1.msra.mxu0 0.0
        %563 = vmatprep.subr.mxu0 0.0
        %564 = vmatpush1.msra.mxu0 0.0
        %565 = vmatprep.subr.mxu0 0.0
        %566 = vmatpush1.msra.mxu0 0.0
        %567 = vmatprep.subr.mxu0 0.0
        %568 = vmatpush1.msra.mxu0 0.0
        %569 = vmatprep.subr.mxu0 0.0
        %570 = vmatpush1.msra.mxu0 0.0
        %571 = vmatprep.subr.mxu0 0.0
        %572 = vmatpush1.msra.mxu0 0.0
        %573 = vmatprep.subr.mxu0 0.0
        %574 = vmatpush1.msra.mxu0 0.0
        %575 = vmatprep.subr.mxu0 0.0
        %576 = vmatpush1.msra.mxu0 0.0
        %577 = vmatprep.subr.mxu0 0.0
        %578 = vmatpush1.msra.mxu0 0.0
        %579 = vmatprep.subr.mxu0 0.0
        %580 = vmatpush1.msra.mxu0 0.0
        %581 = vmatprep.mubr.f32.mxu0 0.0
        %v582 = vand.u32 %v183, 4294901760
        %v583 = vsub.f32 %v183, %v582
        %v584 = vand.u32 %v583, 4294901760
        %585 = vmatmul.mubr.f32.gmra.mrb[0].mxu0 %v584
        %v586 = vpop.f32.mrb[0].mxu0
        %v587 = vadd.f32 %v489, %v586
        %v588 = vpop.f32.mrb[0].mxu0
        %589 = vmatprep.mubr.f32.mxu0 0.0
        %v590 = vand.u32 %v186, 4294901760
        %v591 = vsub.f32 %v186, %v590
        %v592 = vand.u32 %v591, 4294901760
        %593 = vmatmul.mubr.f32.gmra.mrb[0].mxu0 %v592
        %v594 = vpop.f32.mrb[0].mxu0
        %v595 = vadd.f32 %v496, %v594
        %v596 = vpop.f32.mrb[0].mxu0
        %597 = vmatprep.mubr.f32.mxu0 0.0
        %v598 = vand.u32 %v189, 4294901760
        %v599 = vsub.f32 %v189, %v598
        %v600 = vand.u32 %v599, 4294901760
        %601 = vmatmul.mubr.f32.gmra.mrb[0].mxu0 %v600
        %v602 = vpop.f32.mrb[0].mxu0
        %v603 = vadd.f32 %v503, %v602
        %v604 = vpop.f32.mrb[0].mxu0
        %605 = vmatprep.mubr.f32.mxu0 0.0
        %v606 = vand.u32 %v192, 4294901760
        %v607 = vsub.f32 %v192, %v606
        %v608 = vand.u32 %v607, 4294901760
        %609 = vmatmul.mubr.f32.gmra.mrb[0].mxu0 %v608
        %v610 = vpop.f32.mrb[0].mxu0
        %v611 = vadd.f32 %v510, %v610
        %v612 = vpop.f32.mrb[0].mxu0
        %613 = vdwg.mxu0
        %614 = vmatprep.subr.mxu0 0.0
        %v615 = vand.u32 %v177, 4294901760
        %v616 = vsub.f32 %v177, %v615
        %v617 = vand.u32 %v616, 4294901760
        %618 = vmatpush1.msra.mxu0 %v617
        %619 = vmatprep.subr.mxu0 0.0
        %v620 = vand.u32 %v178, 4294901760
        %v621 = vsub.f32 %v178, %v620
        %v622 = vand.u32 %v621, 4294901760
        %623 = vmatpush1.msra.mxu0 %v622
        %624 = vmatprep.subr.mxu0 0.0
        %v625 = vand.u32 %v179, 4294901760
        %v626 = vsub.f32 %v179, %v625
        %v627 = vand.u32 %v626, 4294901760
        %628 = vmatpush1.msra.mxu0 %v627
        %629 = vmatprep.subr.mxu0 0.0
        %v630 = vand.u32 %v180, 4294901760
        %v631 = vsub.f32 %v180, %v630
        %v632 = vand.u32 %v631, 4294901760
        %633 = vmatpush1.msra.mxu0 %v632
        %634 = vmatprep.subr.mxu0 0.0
        %635 = vmatpush1.msra.mxu0 0.0
        %636 = vmatprep.subr.mxu0 0.0
        %637 = vmatpush1.msra.mxu0 0.0
        %638 = vmatprep.subr.mxu0 0.0
        %639 = vmatpush1.msra.mxu0 0.0
        %640 = vmatprep.subr.mxu0 0.0
        %641 = vmatpush1.msra.mxu0 0.0
        %642 = vmatprep.subr.mxu0 0.0
        %643 = vmatpush1.msra.mxu0 0.0
        %644 = vmatprep.subr.mxu0 0.0
        %645 = vmatpush1.msra.mxu0 0.0
        %646 = vmatprep.subr.mxu0 0.0
        %647 = vmatpush1.msra.mxu0 0.0
        %648 = vmatprep.subr.mxu0 0.0
        %649 = vmatpush1.msra.mxu0 0.0
        %650 = vmatprep.subr.mxu0 0.0
        %651 = vmatpush1.msra.mxu0 0.0
        %652 = vmatprep.subr.mxu0 0.0
        %653 = vmatpush1.msra.mxu0 0.0
        %654 = vmatprep.subr.mxu0 0.0
        %655 = vmatpush1.msra.mxu0 0.0
        %656 = vmatprep.subr.mxu0 0.0
        %657 = vmatpush1.msra.mxu0 0.0
        %658 = vmatprep.subr.mxu0 0.0
        %659 = vmatpush1.msra.mxu0 0.0
        %660 = vmatprep.subr.mxu0 0.0
        %661 = vmatpush1.msra.mxu0 0.0
        %662 = vmatprep.subr.mxu0 0.0
        %663 = vmatpush1.msra.mxu0 0.0
        %664 = vmatprep.subr.mxu0 0.0
        %665 = vmatpush1.msra.mxu0 0.0
        %666 = vmatprep.subr.mxu0 0.0
        %667 = vmatpush1.msra.mxu0 0.0
        %668 = vmatprep.subr.mxu0 0.0
        %669 = vmatpush1.msra.mxu0 0.0
        %670 = vmatprep.subr.mxu0 0.0
        %671 = vmatpush1.msra.mxu0 0.0
        %672 = vmatprep.subr.mxu0 0.0
        %673 = vmatpush1.msra.mxu0 0.0
        %674 = vmatprep.subr.mxu0 0.0
        %675 = vmatpush1.msra.mxu0 0.0
        %676 = vmatprep.subr.mxu0 0.0
        %677 = vmatpush1.msra.mxu0 0.0
        %678 = vmatprep.subr.mxu0 0.0
        %679 = vmatpush1.msra.mxu0 0.0
        %680 = vmatprep.subr.mxu0 0.0
        %681 = vmatpush1.msra.mxu0 0.0
        %682 = vmatprep.subr.mxu0 0.0
        %683 = vmatpush1.msra.mxu0 0.0
        %684 = vmatprep.subr.mxu0 0.0
        %685 = vmatpush1.msra.mxu0 0.0
        %686 = vmatprep.subr.mxu0 0.0
        %687 = vmatpush1.msra.mxu0 0.0
        %688 = vmatprep.subr.mxu0 0.0
        %689 = vmatpush1.msra.mxu0 0.0
        %690 = vmatprep.mubr.f32.mxu0 0.0
        %v691 = vand.u32 %v183, 4294901760
        %692 = vmatmul.mubr.f32.gmra.mrb[0].mxu0 %v691
        %v693 = vpop.f32.mrb[0].mxu0
        %v694 = vadd.f32 %v587, %v693
        %v695 = vpop.f32.mrb[0].mxu0
        %696 = vmatprep.mubr.f32.mxu0 0.0
        %v697 = vand.u32 %v186, 4294901760
        %698 = vmatmul.mubr.f32.gmra.mrb[0].mxu0 %v697
        %v699 = vpop.f32.mrb[0].mxu0
        %v700 = vadd.f32 %v595, %v699
        %v701 = vpop.f32.mrb[0].mxu0
        %702 = vmatprep.mubr.f32.mxu0 0.0
        %v703 = vand.u32 %v189, 4294901760
        %704 = vmatmul.mubr.f32.gmra.mrb[0].mxu0 %v703
        %v705 = vpop.f32.mrb[0].mxu0
        %v706 = vadd.f32 %v603, %v705
        %v707 = vpop.f32.mrb[0].mxu0
        %708 = vmatprep.mubr.f32.mxu0 0.0
        %v709 = vand.u32 %v192, 4294901760
        %710 = vmatmul.mubr.f32.gmra.mrb[0].mxu0 %v709
        %v711 = vpop.f32.mrb[0].mxu0
        %v712 = vadd.f32 %v611, %v711
        %v713 = vpop.f32.mrb[0].mxu0
        %714 = vdwg.mxu0
        %715 = vmatprep.subr.mxu0 0.0
        %v716 = vand.u32 %v177, 4294901760
        %717 = vmatpush1.msra.mxu0 %v716
        %718 = vmatprep.subr.mxu0 0.0
        %v719 = vand.u32 %v178, 4294901760
        %720 = vmatpush1.msra.mxu0 %v719
        %721 = vmatprep.subr.mxu0 0.0
        %v722 = vand.u32 %v179, 4294901760
        %723 = vmatpush1.msra.mxu0 %v722
        %724 = vmatprep.subr.mxu0 0.0
        %v725 = vand.u32 %v180, 4294901760
        %726 = vmatpush1.msra.mxu0 %v725
        %727 = vmatprep.subr.mxu0 0.0
        %728 = vmatpush1.msra.mxu0 0.0
        %729 = vmatprep.subr.mxu0 0.0
        %730 = vmatpush1.msra.mxu0 0.0
        %731 = vmatprep.subr.mxu0 0.0
        %732 = vmatpush1.msra.mxu0 0.0
        %733 = vmatprep.subr.mxu0 0.0
        %734 = vmatpush1.msra.mxu0 0.0
        %735 = vmatprep.subr.mxu0 0.0
        %736 = vmatpush1.msra.mxu0 0.0
        %737 = vmatprep.subr.mxu0 0.0
        %738 = vmatpush1.msra.mxu0 0.0
        %739 = vmatprep.subr.mxu0 0.0
        %740 = vmatpush1.msra.mxu0 0.0
        %741 = vmatprep.subr.mxu0 0.0
        %742 = vmatpush1.msra.mxu0 0.0
        %743 = vmatprep.subr.mxu0 0.0
        %744 = vmatpush1.msra.mxu0 0.0
        %745 = vmatprep.subr.mxu0 0.0
        %746 = vmatpush1.msra.mxu0 0.0
        %747 = vmatprep.subr.mxu0 0.0
        %748 = vmatpush1.msra.mxu0 0.0
        %749 = vmatprep.subr.mxu0 0.0
        %750 = vmatpush1.msra.mxu0 0.0
        %751 = vmatprep.subr.mxu0 0.0
        %752 = vmatpush1.msra.mxu0 0.0
        %753 = vmatprep.subr.mxu0 0.0
        %754 = vmatpush1.msra.mxu0 0.0
        %755 = vmatprep.subr.mxu0 0.0
        %756 = vmatpush1.msra.mxu0 0.0
        %757 = vmatprep.subr.mxu0 0.0
        %758 = vmatpush1.msra.mxu0 0.0
        %759 = vmatprep.subr.mxu0 0.0
        %760 = vmatpush1.msra.mxu0 0.0
        %761 = vmatprep.subr.mxu0 0.0
        %762 = vmatpush1.msra.mxu0 0.0
        %763 = vmatprep.subr.mxu0 0.0
        %764 = vmatpush1.msra.mxu0 0.0
        %765 = vmatprep.subr.mxu0 0.0
        %766 = vmatpush1.msra.mxu0 0.0
        %767 = vmatprep.subr.mxu0 0.0
        %768 = vmatpush1.msra.mxu0 0.0
        %769 = vmatprep.subr.mxu0 0.0
        %770 = vmatpush1.msra.mxu0 0.0
        %771 = vmatprep.subr.mxu0 0.0
        %772 = vmatpush1.msra.mxu0 0.0
        %773 = vmatprep.subr.mxu0 0.0
        %774 = vmatpush1.msra.mxu0 0.0
        %775 = vmatprep.subr.mxu0 0.0
        %776 = vmatpush1.msra.mxu0 0.0
        %777 = vmatprep.subr.mxu0 0.0
        %778 = vmatpush1.msra.mxu0 0.0
        %779 = vmatprep.subr.mxu0 0.0
        %780 = vmatpush1.msra.mxu0 0.0
        %781 = vmatprep.subr.mxu0 0.0
        %782 = vmatpush1.msra.mxu0 0.0
        %783 = vmatprep.mubr.f32.mxu0 0.0
        %v784 = vand.u32 %v183, 4294901760
        %785 = vmatmul.mubr.f32.gmra.mrb[0].mxu0 %v784
        %v786 = vpop.f32.mrb[0].mxu0
        %v787 = vadd.f32 %v694, %v786
        %v788 = vpop.f32.mrb[0].mxu0
        %789 = vmatprep.mubr.f32.mxu0 0.0
        %v790 = vand.u32 %v186, 4294901760
        %791 = vmatmul.mubr.f32.gmra.mrb[0].mxu0 %v790
        %v792 = vpop.f32.mrb[0].mxu0
        %v793 = vadd.f32 %v700, %v792
        %v794 = vpop.f32.mrb[0].mxu0
        %795 = vmatprep.mubr.f32.mxu0 0.0
        %v796 = vand.u32 %v189, 4294901760
        %797 = vmatmul.mubr.f32.gmra.mrb[0].mxu0 %v796
        %v798 = vpop.f32.mrb[0].mxu0
        %v799 = vadd.f32 %v706, %v798
        %v800 = vpop.f32.mrb[0].mxu0
        %801 = vmatprep.mubr.f32.mxu0 0.0
        %v802 = vand.u32 %v192, 4294901760
        %803 = vmatmul.mubr.f32.gmra.mrb[0].mxu0 %v802
        %v804 = vpop.f32.mrb[0].mxu0
        %v805 = vadd.f32 %v712, %v804
        %v806 = vpop.f32.mrb[0].mxu0
        %807 = vdwg.mxu0
        %vm808 = vcmask 64512
        %809 = vst.msk [vmem:[%s161] sm:$0xff] %vm808, %v787
        %810 = vst.msk [vmem:[%s161 + $0x8] sm:$0xff] %vm808, %v793
        %811 = vst.msk [vmem:[%s161 + $0x10] sm:$0xff] %vm808, %v799
        %812 = vst.msk [vmem:[%s161 + $0x18] sm:$0xff] %vm808, %v805
        %s813 = scalar_lea.vmem %s0, 32
        %v814 = vld [vmem:[%s813] sm:$0xff]
        %v815 = vld [vmem:[%s813 + $0x8] sm:$0xff]
        %v816 = vld [vmem:[%s813 + $0x10] sm:$0xff]
        %v817 = vld [vmem:[%s813 + $0x18] sm:$0xff]
        %818 = vmatprep.subr.mxu0 0.0
        %v819 = vand.u32 %v814, 4294901760
        %820 = vmatpush1.msra.mxu0 %v819
        %821 = vmatprep.subr.mxu0 0.0
        %v822 = vand.u32 %v815, 4294901760
        %823 = vmatpush1.msra.mxu0 %v822
        %824 = vmatprep.subr.mxu0 0.0
        %v825 = vand.u32 %v816, 4294901760
        %826 = vmatpush1.msra.mxu0 %v825
        %827 = vmatprep.subr.mxu0 0.0
        %v828 = vand.u32 %v817, 4294901760
        %829 = vmatpush1.msra.mxu0 %v828
        %830 = vmatprep.subr.mxu0 0.0
        %831 = vmatpush1.msra.mxu0 0.0
        %832 = vmatprep.subr.mxu0 0.0
        %833 = vmatpush1.msra.mxu0 0.0
        %834 = vmatprep.subr.mxu0 0.0
        %835 = vmatpush1.msra.mxu0 0.0
        %836 = vmatprep.subr.mxu0 0.0
        %837 = vmatpush1.msra.mxu0 0.0
        %838 = vmatprep.subr.mxu0 0.0
        %839 = vmatpush1.msra.mxu0 0.0
        %840 = vmatprep.subr.mxu0 0.0
        %841 = vmatpush1.msra.mxu0 0.0
        %842 = vmatprep.subr.mxu0 0.0
        %843 = vmatpush1.msra.mxu0 0.0
        %844 = vmatprep.subr.mxu0 0.0
        %845 = vmatpush1.msra.mxu0 0.0
        %846 = vmatprep.subr.mxu0 0.0
        %847 = vmatpush1.msra.mxu0 0.0
        %848 = vmatprep.subr.mxu0 0.0
        %849 = vmatpush1.msra.mxu0 0.0
        %850 = vmatprep.subr.mxu0 0.0
        %851 = vmatpush1.msra.mxu0 0.0
        %852 = vmatprep.subr.mxu0 0.0
        %853 = vmatpush1.msra.mxu0 0.0
        %854 = vmatprep.subr.mxu0 0.0
        %855 = vmatpush1.msra.mxu0 0.0
        %856 = vmatprep.subr.mxu0 0.0
        %857 = vmatpush1.msra.mxu0 0.0
        %858 = vmatprep.subr.mxu0 0.0
        %859 = vmatpush1.msra.mxu0 0.0
        %860 = vmatprep.subr.mxu0 0.0
        %861 = vmatpush1.msra.mxu0 0.0
        %862 = vmatprep.subr.mxu0 0.0
        %863 = vmatpush1.msra.mxu0 0.0
        %864 = vmatprep.subr.mxu0 0.0
        %865 = vmatpush1.msra.mxu0 0.0
        %866 = vmatprep.subr.mxu0 0.0
        %867 = vmatpush1.msra.mxu0 0.0
        %868 = vmatprep.subr.mxu0 0.0
        %869 = vmatpush1.msra.mxu0 0.0
        %870 = vmatprep.subr.mxu0 0.0
        %871 = vmatpush1.msra.mxu0 0.0
        %872 = vmatprep.subr.mxu0 0.0
        %873 = vmatpush1.msra.mxu0 0.0
        %874 = vmatprep.subr.mxu0 0.0
        %875 = vmatpush1.msra.mxu0 0.0
        %876 = vmatprep.subr.mxu0 0.0
        %877 = vmatpush1.msra.mxu0 0.0
        %878 = vmatprep.subr.mxu0 0.0
        %879 = vmatpush1.msra.mxu0 0.0
        %880 = vmatprep.subr.mxu0 0.0
        %881 = vmatpush1.msra.mxu0 0.0
        %882 = vmatprep.subr.mxu0 0.0
        %883 = vmatpush1.msra.mxu0 0.0
        %884 = vmatprep.subr.mxu0 0.0
        %885 = vmatpush1.msra.mxu0 0.0
        %886 = vmatprep.mubr.f32.mxu0 0.0
        %v887 = vand.u32 %v183, 4294901760
        %v888 = vsub.f32 %v183, %v887
        %v889 = vand.u32 %v888, 4294901760
        %v890 = vsub.f32 %v888, %v889
        %v891 = vand.u32 %v890, 4294901760
        %892 = vmatmul.mubr.f32.gmra.mrb[0].mxu0 %v891
        %v893 = vpop.f32.mrb[0].mxu0
        %v894 = vadd.f32 0.0, %v893
        %v895 = vpop.f32.mrb[0].mxu0
        %896 = vmatprep.mubr.f32.mxu0 0.0
        %v897 = vand.u32 %v186, 4294901760
        %v898 = vsub.f32 %v186, %v897
        %v899 = vand.u32 %v898, 4294901760
        %v900 = vsub.f32 %v898, %v899
        %v901 = vand.u32 %v900, 4294901760
        %902 = vmatmul.mubr.f32.gmra.mrb[0].mxu0 %v901
        %v903 = vpop.f32.mrb[0].mxu0
        %v904 = vadd.f32 0.0, %v903
        %v905 = vpop.f32.mrb[0].mxu0
        %906 = vmatprep.mubr.f32.mxu0 0.0
        %v907 = vand.u32 %v189, 4294901760
        %v908 = vsub.f32 %v189, %v907
        %v909 = vand.u32 %v908, 4294901760
        %v910 = vsub.f32 %v908, %v909
        %v911 = vand.u32 %v910, 4294901760
        %912 = vmatmul.mubr.f32.gmra.mrb[0].mxu0 %v911
        %v913 = vpop.f32.mrb[0].mxu0
        %v914 = vadd.f32 0.0, %v913
        %v915 = vpop.f32.mrb[0].mxu0
        %916 = vmatprep.mubr.f32.mxu0 0.0
        %v917 = vand.u32 %v192, 4294901760
        %v918 = vsub.f32 %v192, %v917
        %v919 = vand.u32 %v918, 4294901760
        %v920 = vsub.f32 %v918, %v919
        %v921 = vand.u32 %v920, 4294901760
        %922 = vmatmul.mubr.f32.gmra.mrb[0].mxu0 %v921
        %v923 = vpop.f32.mrb[0].mxu0
        %v924 = vadd.f32 0.0, %v923
        %v925 = vpop.f32.mrb[0].mxu0
        %926 = vdwg.mxu0
        %927 = vmatprep.subr.mxu0 0.0
        %v928 = vand.u32 %v814, 4294901760
        %v929 = vsub.f32 %v814, %v928
        %v930 = vand.u32 %v929, 4294901760
        %v931 = vsub.f32 %v929, %v930
        %v932 = vand.u32 %v931, 4294901760
        %933 = vmatpush1.msra.mxu0 %v932
        %934 = vmatprep.subr.mxu0 0.0
        %v935 = vand.u32 %v815, 4294901760
        %v936 = vsub.f32 %v815, %v935
        %v937 = vand.u32 %v936, 4294901760
        %v938 = vsub.f32 %v936, %v937
        %v939 = vand.u32 %v938, 4294901760
        %940 = vmatpush1.msra.mxu0 %v939
        %941 = vmatprep.subr.mxu0 0.0
        %v942 = vand.u32 %v816, 4294901760
        %v943 = vsub.f32 %v816, %v942
        %v944 = vand.u32 %v943, 4294901760
        %v945 = vsub.f32 %v943, %v944
        %v946 = vand.u32 %v945, 4294901760
        %947 = vmatpush1.msra.mxu0 %v946
        %948 = vmatprep.subr.mxu0 0.0
        %v949 = vand.u32 %v817, 4294901760
        %v950 = vsub.f32 %v817, %v949
        %v951 = vand.u32 %v950, 4294901760
        %v952 = vsub.f32 %v950, %v951
        %v953 = vand.u32 %v952, 4294901760
        %954 = vmatpush1.msra.mxu0 %v953
        %955 = vmatprep.subr.mxu0 0.0
        %956 = vmatpush1.msra.mxu0 0.0
        %957 = vmatprep.subr.mxu0 0.0
        %958 = vmatpush1.msra.mxu0 0.0
        %959 = vmatprep.subr.mxu0 0.0
        %960 = vmatpush1.msra.mxu0 0.0
        %961 = vmatprep.subr.mxu0 0.0
        %962 = vmatpush1.msra.mxu0 0.0
        %963 = vmatprep.subr.mxu0 0.0
        %964 = vmatpush1.msra.mxu0 0.0
        %965 = vmatprep.subr.mxu0 0.0
        %966 = vmatpush1.msra.mxu0 0.0
        %967 = vmatprep.subr.mxu0 0.0
        %968 = vmatpush1.msra.mxu0 0.0
        %969 = vmatprep.subr.mxu0 0.0
        %970 = vmatpush1.msra.mxu0 0.0
        %971 = vmatprep.subr.mxu0 0.0
        %972 = vmatpush1.msra.mxu0 0.0
        %973 = vmatprep.subr.mxu0 0.0
        %974 = vmatpush1.msra.mxu0 0.0
        %975 = vmatprep.subr.mxu0 0.0
        %976 = vmatpush1.msra.mxu0 0.0
        %977 = vmatprep.subr.mxu0 0.0
        %978 = vmatpush1.msra.mxu0 0.0
        %979 = vmatprep.subr.mxu0 0.0
        %980 = vmatpush1.msra.mxu0 0.0
        %981 = vmatprep.subr.mxu0 0.0
        %982 = vmatpush1.msra.mxu0 0.0
        %983 = vmatprep.subr.mxu0 0.0
        %984 = vmatpush1.msra.mxu0 0.0
        %985 = vmatprep.subr.mxu0 0.0
        %986 = vmatpush1.msra.mxu0 0.0
        %987 = vmatprep.subr.mxu0 0.0
        %988 = vmatpush1.msra.mxu0 0.0
        %989 = vmatprep.subr.mxu0 0.0
        %990 = vmatpush1.msra.mxu0 0.0
        %991 = vmatprep.subr.mxu0 0.0
        %992 = vmatpush1.msra.mxu0 0.0
        %993 = vmatprep.subr.mxu0 0.0
        %994 = vmatpush1.msra.mxu0 0.0
        %995 = vmatprep.subr.mxu0 0.0
        %996 = vmatpush1.msra.mxu0 0.0
        %997 = vmatprep.subr.mxu0 0.0
        %998 = vmatpush1.msra.mxu0 0.0
        %999 = vmatprep.subr.mxu0 0.0
        %1000 = vmatpush1.msra.mxu0 0.0
        %1001 = vmatprep.subr.mxu0 0.0
        %1002 = vmatpush1.msra.mxu0 0.0
        %1003 = vmatprep.subr.mxu0 0.0
        %1004 = vmatpush1.msra.mxu0 0.0
        %1005 = vmatprep.subr.mxu0 0.0
        %1006 = vmatpush1.msra.mxu0 0.0
        %1007 = vmatprep.subr.mxu0 0.0
        %1008 = vmatpush1.msra.mxu0 0.0
        %1009 = vmatprep.subr.mxu0 0.0
        %1010 = vmatpush1.msra.mxu0 0.0
        %1011 = vmatprep.mubr.f32.mxu0 0.0
        %v1012 = vand.u32 %v183, 4294901760
        %1013 = vmatmul.mubr.f32.gmra.mrb[0].mxu0 %v1012
        %v1014 = vpop.f32.mrb[0].mxu0
        %v1015 = vadd.f32 %v894, %v1014
        %v1016 = vpop.f32.mrb[0].mxu0
        %1017 = vmatprep.mubr.f32.mxu0 0.0
        %v1018 = vand.u32 %v186, 4294901760
        %1019 = vmatmul.mubr.f32.gmra.mrb[0].mxu0 %v1018
        %v1020 = vpop.f32.mrb[0].mxu0
        %v1021 = vadd.f32 %v904, %v1020
        %v1022 = vpop.f32.mrb[0].mxu0
        %1023 = vmatprep.mubr.f32.mxu0 0.0
        %v1024 = vand.u32 %v189, 4294901760
        %1025 = vmatmul.mubr.f32.gmra.mrb[0].mxu0 %v1024
        %v1026 = vpop.f32.mrb[0].mxu0
        %v1027 = vadd.f32 %v914, %v1026
        %v1028 = vpop.f32.mrb[0].mxu0
        %1029 = vmatprep.mubr.f32.mxu0 0.0
        %v1030 = vand.u32 %v192, 4294901760
        %1031 = vmatmul.mubr.f32.gmra.mrb[0].mxu0 %v1030
        %v1032 = vpop.f32.mrb[0].mxu0
        %v1033 = vadd.f32 %v924, %v1032
        %v1034 = vpop.f32.mrb[0].mxu0
        %1035 = vdwg.mxu0
        %1036 = vmatprep.subr.mxu0 0.0
        %v1037 = vand.u32 %v814, 4294901760
        %v1038 = vsub.f32 %v814, %v1037
        %1039 = vmatpush1.msra.mxu0 %v1038
        %1040 = vmatprep.subr.mxu0 0.0
        %v1041 = vand.u32 %v815, 4294901760
        %v1042 = vsub.f32 %v815, %v1041
        %1043 = vmatpush1.msra.mxu0 %v1042
        %1044 = vmatprep.subr.mxu0 0.0
        %v1045 = vand.u32 %v816, 4294901760
        %v1046 = vsub.f32 %v816, %v1045
        %1047 = vmatpush1.msra.mxu0 %v1046
        %1048 = vmatprep.subr.mxu0 0.0
        %v1049 = vand.u32 %v817, 4294901760
        %v1050 = vsub.f32 %v817, %v1049
        %1051 = vmatpush1.msra.mxu0 %v1050
        %1052 = vmatprep.subr.mxu0 0.0
        %1053 = vmatpush1.msra.mxu0 0.0
        %1054 = vmatprep.subr.mxu0 0.0
        %1055 = vmatpush1.msra.mxu0 0.0
        %1056 = vmatprep.subr.mxu0 0.0
        %1057 = vmatpush1.msra.mxu0 0.0
        %1058 = vmatprep.subr.mxu0 0.0
        %1059 = vmatpush1.msra.mxu0 0.0
        %1060 = vmatprep.subr.mxu0 0.0
        %1061 = vmatpush1.msra.mxu0 0.0
        %1062 = vmatprep.subr.mxu0 0.0
        %1063 = vmatpush1.msra.mxu0 0.0
        %1064 = vmatprep.subr.mxu0 0.0
        %1065 = vmatpush1.msra.mxu0 0.0
        %1066 = vmatprep.subr.mxu0 0.0
        %1067 = vmatpush1.msra.mxu0 0.0
        %1068 = vmatprep.subr.mxu0 0.0
        %1069 = vmatpush1.msra.mxu0 0.0
        %1070 = vmatprep.subr.mxu0 0.0
        %1071 = vmatpush1.msra.mxu0 0.0
        %1072 = vmatprep.subr.mxu0 0.0
        %1073 = vmatpush1.msra.mxu0 0.0
        %1074 = vmatprep.subr.mxu0 0.0
        %1075 = vmatpush1.msra.mxu0 0.0
        %1076 = vmatprep.subr.mxu0 0.0
        %1077 = vmatpush1.msra.mxu0 0.0
        %1078 = vmatprep.subr.mxu0 0.0
        %1079 = vmatpush1.msra.mxu0 0.0
        %1080 = vmatprep.subr.mxu0 0.0
        %1081 = vmatpush1.msra.mxu0 0.0
        %1082 = vmatprep.subr.mxu0 0.0
        %1083 = vmatpush1.msra.mxu0 0.0
        %1084 = vmatprep.subr.mxu0 0.0
        %1085 = vmatpush1.msra.mxu0 0.0
        %1086 = vmatprep.subr.mxu0 0.0
        %1087 = vmatpush1.msra.mxu0 0.0
        %1088 = vmatprep.subr.mxu0 0.0
        %1089 = vmatpush1.msra.mxu0 0.0
        %1090 = vmatprep.subr.mxu0 0.0
        %1091 = vmatpush1.msra.mxu0 0.0
        %1092 = vmatprep.subr.mxu0 0.0
        %1093 = vmatpush1.msra.mxu0 0.0
        %1094 = vmatprep.subr.mxu0 0.0
        %1095 = vmatpush1.msra.mxu0 0.0
        %1096 = vmatprep.subr.mxu0 0.0
        %1097 = vmatpush1.msra.mxu0 0.0
        %1098 = vmatprep.subr.mxu0 0.0
        %1099 = vmatpush1.msra.mxu0 0.0
        %1100 = vmatprep.subr.mxu0 0.0
        %1101 = vmatpush1.msra.mxu0 0.0
        %1102 = vmatprep.subr.mxu0 0.0
        %1103 = vmatpush1.msra.mxu0 0.0
        %1104 = vmatprep.subr.mxu0 0.0
        %1105 = vmatpush1.msra.mxu0 0.0
        %1106 = vmatprep.subr.mxu0 0.0
        %1107 = vmatpush1.msra.mxu0 0.0
        %1108 = vmatprep.mubr.f32.mxu0 0.0
        %v1109 = vand.u32 %v183, 4294901760
        %v1110 = vsub.f32 %v183, %v1109
        %1111 = vmatmul.mubr.f32.gmra.mrb[0].mxu0 %v1110
        %v1112 = vpop.f32.mrb[0].mxu0
        %v1113 = vadd.f32 %v1015, %v1112
        %v1114 = vpop.f32.mrb[0].mxu0
        %1115 = vmatprep.mubr.f32.mxu0 0.0
        %v1116 = vand.u32 %v186, 4294901760
        %v1117 = vsub.f32 %v186, %v1116
        %1118 = vmatmul.mubr.f32.gmra.mrb[0].mxu0 %v1117
        %v1119 = vpop.f32.mrb[0].mxu0
        %v1120 = vadd.f32 %v1021, %v1119
        %v1121 = vpop.f32.mrb[0].mxu0
        %1122 = vmatprep.mubr.f32.mxu0 0.0
        %v1123 = vand.u32 %v189, 4294901760
        %v1124 = vsub.f32 %v189, %v1123
        %1125 = vmatmul.mubr.f32.gmra.mrb[0].mxu0 %v1124
        %v1126 = vpop.f32.mrb[0].mxu0
        %v1127 = vadd.f32 %v1027, %v1126
        %v1128 = vpop.f32.mrb[0].mxu0
        %1129 = vmatprep.mubr.f32.mxu0 0.0
        %v1130 = vand.u32 %v192, 4294901760
        %v1131 = vsub.f32 %v192, %v1130
        %1132 = vmatmul.mubr.f32.gmra.mrb[0].mxu0 %v1131
        %v1133 = vpop.f32.mrb[0].mxu0
        %v1134 = vadd.f32 %v1033, %v1133
        %v1135 = vpop.f32.mrb[0].mxu0
        %1136 = vdwg.mxu0
        %1137 = vmatprep.subr.mxu0 0.0
        %v1138 = vand.u32 %v814, 4294901760
        %1139 = vmatpush1.msra.mxu0 %v1138
        %1140 = vmatprep.subr.mxu0 0.0
        %v1141 = vand.u32 %v815, 4294901760
        %1142 = vmatpush1.msra.mxu0 %v1141
        %1143 = vmatprep.subr.mxu0 0.0
        %v1144 = vand.u32 %v816, 4294901760
        %1145 = vmatpush1.msra.mxu0 %v1144
        %1146 = vmatprep.subr.mxu0 0.0
        %v1147 = vand.u32 %v817, 4294901760
        %1148 = vmatpush1.msra.mxu0 %v1147
        %1149 = vmatprep.subr.mxu0 0.0
        %1150 = vmatpush1.msra.mxu0 0.0
        %1151 = vmatprep.subr.mxu0 0.0
        %1152 = vmatpush1.msra.mxu0 0.0
        %1153 = vmatprep.subr.mxu0 0.0
        %1154 = vmatpush1.msra.mxu0 0.0
        %1155 = vmatprep.subr.mxu0 0.0
        %1156 = vmatpush1.msra.mxu0 0.0
        %1157 = vmatprep.subr.mxu0 0.0
        %1158 = vmatpush1.msra.mxu0 0.0
        %1159 = vmatprep.subr.mxu0 0.0
        %1160 = vmatpush1.msra.mxu0 0.0
        %1161 = vmatprep.subr.mxu0 0.0
        %1162 = vmatpush1.msra.mxu0 0.0
        %1163 = vmatprep.subr.mxu0 0.0
        %1164 = vmatpush1.msra.mxu0 0.0
        %1165 = vmatprep.subr.mxu0 0.0
        %1166 = vmatpush1.msra.mxu0 0.0
        %1167 = vmatprep.subr.mxu0 0.0
        %1168 = vmatpush1.msra.mxu0 0.0
        %1169 = vmatprep.subr.mxu0 0.0
        %1170 = vmatpush1.msra.mxu0 0.0
        %1171 = vmatprep.subr.mxu0 0.0
        %1172 = vmatpush1.msra.mxu0 0.0
        %1173 = vmatprep.subr.mxu0 0.0
        %1174 = vmatpush1.msra.mxu0 0.0
        %1175 = vmatprep.subr.mxu0 0.0
        %1176 = vmatpush1.msra.mxu0 0.0
        %1177 = vmatprep.subr.mxu0 0.0
        %1178 = vmatpush1.msra.mxu0 0.0
        %1179 = vmatprep.subr.mxu0 0.0
        %1180 = vmatpush1.msra.mxu0 0.0
        %1181 = vmatprep.subr.mxu0 0.0
        %1182 = vmatpush1.msra.mxu0 0.0
        %1183 = vmatprep.subr.mxu0 0.0
        %1184 = vmatpush1.msra.mxu0 0.0
        %1185 = vmatprep.subr.mxu0 0.0
        %1186 = vmatpush1.msra.mxu0 0.0
        %1187 = vmatprep.subr.mxu0 0.0
        %1188 = vmatpush1.msra.mxu0 0.0
        %1189 = vmatprep.subr.mxu0 0.0
        %1190 = vmatpush1.msra.mxu0 0.0
        %1191 = vmatprep.subr.mxu0 0.0
        %1192 = vmatpush1.msra.mxu0 0.0
        %1193 = vmatprep.subr.mxu0 0.0
        %1194 = vmatpush1.msra.mxu0 0.0
        %1195 = vmatprep.subr.mxu0 0.0
        %1196 = vmatpush1.msra.mxu0 0.0
        %1197 = vmatprep.subr.mxu0 0.0
        %1198 = vmatpush1.msra.mxu0 0.0
        %1199 = vmatprep.subr.mxu0 0.0
        %1200 = vmatpush1.msra.mxu0 0.0
        %1201 = vmatprep.subr.mxu0 0.0
        %1202 = vmatpush1.msra.mxu0 0.0
        %1203 = vmatprep.subr.mxu0 0.0
        %1204 = vmatpush1.msra.mxu0 0.0
        %1205 = vmatprep.mubr.f32.mxu0 0.0
        %v1206 = vand.u32 %v183, 4294901760
        %v1207 = vsub.f32 %v183, %v1206
        %v1208 = vand.u32 %v1207, 4294901760
        %1209 = vmatmul.mubr.f32.gmra.mrb[0].mxu0 %v1208
        %v1210 = vpop.f32.mrb[0].mxu0
        %v1211 = vadd.f32 %v1113, %v1210
        %v1212 = vpop.f32.mrb[0].mxu0
        %1213 = vmatprep.mubr.f32.mxu0 0.0
        %v1214 = vand.u32 %v186, 4294901760
        %v1215 = vsub.f32 %v186, %v1214
        %v1216 = vand.u32 %v1215, 4294901760
        %1217 = vmatmul.mubr.f32.gmra.mrb[0].mxu0 %v1216
        %v1218 = vpop.f32.mrb[0].mxu0
        %v1219 = vadd.f32 %v1120, %v1218
        %v1220 = vpop.f32.mrb[0].mxu0
        %1221 = vmatprep.mubr.f32.mxu0 0.0
        %v1222 = vand.u32 %v189, 4294901760
        %v1223 = vsub.f32 %v189, %v1222
        %v1224 = vand.u32 %v1223, 4294901760
        %1225 = vmatmul.mubr.f32.gmra.mrb[0].mxu0 %v1224
        %v1226 = vpop.f32.mrb[0].mxu0
        %v1227 = vadd.f32 %v1127, %v1226
        %v1228 = vpop.f32.mrb[0].mxu0
        %1229 = vmatprep.mubr.f32.mxu0 0.0
        %v1230 = vand.u32 %v192, 4294901760
        %v1231 = vsub.f32 %v192, %v1230
        %v1232 = vand.u32 %v1231, 4294901760
        %1233 = vmatmul.mubr.f32.gmra.mrb[0].mxu0 %v1232
        %v1234 = vpop.f32.mrb[0].mxu0
        %v1235 = vadd.f32 %v1134, %v1234
        %v1236 = vpop.f32.mrb[0].mxu0
        %1237 = vdwg.mxu0
        %1238 = vmatprep.subr.mxu0 0.0
        %v1239 = vand.u32 %v814, 4294901760
        %v1240 = vsub.f32 %v814, %v1239
        %v1241 = vand.u32 %v1240, 4294901760
        %1242 = vmatpush1.msra.mxu0 %v1241
        %1243 = vmatprep.subr.mxu0 0.0
        %v1244 = vand.u32 %v815, 4294901760
        %v1245 = vsub.f32 %v815, %v1244
        %v1246 = vand.u32 %v1245, 4294901760
        %1247 = vmatpush1.msra.mxu0 %v1246
        %1248 = vmatprep.subr.mxu0 0.0
        %v1249 = vand.u32 %v816, 4294901760
        %v1250 = vsub.f32 %v816, %v1249
        %v1251 = vand.u32 %v1250, 4294901760
        %1252 = vmatpush1.msra.mxu0 %v1251
        %1253 = vmatprep.subr.mxu0 0.0
        %v1254 = vand.u32 %v817, 4294901760
        %v1255 = vsub.f32 %v817, %v1254
        %v1256 = vand.u32 %v1255, 4294901760
        %1257 = vmatpush1.msra.mxu0 %v1256
        %1258 = vmatprep.subr.mxu0 0.0
        %1259 = vmatpush1.msra.mxu0 0.0
        %1260 = vmatprep.subr.mxu0 0.0
        %1261 = vmatpush1.msra.mxu0 0.0
        %1262 = vmatprep.subr.mxu0 0.0
        %1263 = vmatpush1.msra.mxu0 0.0
        %1264 = vmatprep.subr.mxu0 0.0
        %1265 = vmatpush1.msra.mxu0 0.0
        %1266 = vmatprep.subr.mxu0 0.0
        %1267 = vmatpush1.msra.mxu0 0.0
        %1268 = vmatprep.subr.mxu0 0.0
        %1269 = vmatpush1.msra.mxu0 0.0
        %1270 = vmatprep.subr.mxu0 0.0
        %1271 = vmatpush1.msra.mxu0 0.0
        %1272 = vmatprep.subr.mxu0 0.0
        %1273 = vmatpush1.msra.mxu0 0.0
        %1274 = vmatprep.subr.mxu0 0.0
        %1275 = vmatpush1.msra.mxu0 0.0
        %1276 = vmatprep.subr.mxu0 0.0
        %1277 = vmatpush1.msra.mxu0 0.0
        %1278 = vmatprep.subr.mxu0 0.0
        %1279 = vmatpush1.msra.mxu0 0.0
        %1280 = vmatprep.subr.mxu0 0.0
        %1281 = vmatpush1.msra.mxu0 0.0
        %1282 = vmatprep.subr.mxu0 0.0
        %1283 = vmatpush1.msra.mxu0 0.0
        %1284 = vmatprep.subr.mxu0 0.0
        %1285 = vmatpush1.msra.mxu0 0.0
        %1286 = vmatprep.subr.mxu0 0.0
        %1287 = vmatpush1.msra.mxu0 0.0
        %1288 = vmatprep.subr.mxu0 0.0
        %1289 = vmatpush1.msra.mxu0 0.0
        %1290 = vmatprep.subr.mxu0 0.0
        %1291 = vmatpush1.msra.mxu0 0.0
        %1292 = vmatprep.subr.mxu0 0.0
        %1293 = vmatpush1.msra.mxu0 0.0
        %1294 = vmatprep.subr.mxu0 0.0
        %1295 = vmatpush1.msra.mxu0 0.0
        %1296 = vmatprep.subr.mxu0 0.0
        %1297 = vmatpush1.msra.mxu0 0.0
        %1298 = vmatprep.subr.mxu0 0.0
        %1299 = vmatpush1.msra.mxu0 0.0
        %1300 = vmatprep.subr.mxu0 0.0
        %1301 = vmatpush1.msra.mxu0 0.0
        %1302 = vmatprep.subr.mxu0 0.0
        %1303 = vmatpush1.msra.mxu0 0.0
        %1304 = vmatprep.subr.mxu0 0.0
        %1305 = vmatpush1.msra.mxu0 0.0
        %1306 = vmatprep.subr.mxu0 0.0
        %1307 = vmatpush1.msra.mxu0 0.0
        %1308 = vmatprep.subr.mxu0 0.0
        %1309 = vmatpush1.msra.mxu0 0.0
        %1310 = vmatprep.subr.mxu0 0.0
        %1311 = vmatpush1.msra.mxu0 0.0
        %1312 = vmatprep.subr.mxu0 0.0
        %1313 = vmatpush1.msra.mxu0 0.0
        %1314 = vmatprep.mubr.f32.mxu0 0.0
        %v1315 = vand.u32 %v183, 4294901760
        %1316 = vmatmul.mubr.f32.gmra.mrb[0].mxu0 %v1315
        %v1317 = vpop.f32.mrb[0].mxu0
        %v1318 = vadd.f32 %v1211, %v1317
        %v1319 = vpop.f32.mrb[0].mxu0
        %1320 = vmatprep.mubr.f32.mxu0 0.0
        %v1321 = vand.u32 %v186, 4294901760
        %1322 = vmatmul.mubr.f32.gmra.mrb[0].mxu0 %v1321
        %v1323 = vpop.f32.mrb[0].mxu0
        %v1324 = vadd.f32 %v1219, %v1323
        %v1325 = vpop.f32.mrb[0].mxu0
        %1326 = vmatprep.mubr.f32.mxu0 0.0
        %v1327 = vand.u32 %v189, 4294901760
        %1328 = vmatmul.mubr.f32.gmra.mrb[0].mxu0 %v1327
        %v1329 = vpop.f32.mrb[0].mxu0
        %v1330 = vadd.f32 %v1227, %v1329
        %v1331 = vpop.f32.mrb[0].mxu0
        %1332 = vmatprep.mubr.f32.mxu0 0.0
        %v1333 = vand.u32 %v192, 4294901760
        %1334 = vmatmul.mubr.f32.gmra.mrb[0].mxu0 %v1333
        %v1335 = vpop.f32.mrb[0].mxu0
        %v1336 = vadd.f32 %v1235, %v1335
        %v1337 = vpop.f32.mrb[0].mxu0
        %1338 = vdwg.mxu0
        %1339 = vmatprep.subr.mxu0 0.0
        %v1340 = vand.u32 %v814, 4294901760
        %1341 = vmatpush1.msra.mxu0 %v1340
        %1342 = vmatprep.subr.mxu0 0.0
        %v1343 = vand.u32 %v815, 4294901760
        %1344 = vmatpush1.msra.mxu0 %v1343
        %1345 = vmatprep.subr.mxu0 0.0
        %v1346 = vand.u32 %v816, 4294901760
        %1347 = vmatpush1.msra.mxu0 %v1346
        %1348 = vmatprep.subr.mxu0 0.0
        %v1349 = vand.u32 %v817, 4294901760
        %1350 = vmatpush1.msra.mxu0 %v1349
        %1351 = vmatprep.subr.mxu0 0.0
        %1352 = vmatpush1.msra.mxu0 0.0
        %1353 = vmatprep.subr.mxu0 0.0
        %1354 = vmatpush1.msra.mxu0 0.0
        %1355 = vmatprep.subr.mxu0 0.0
        %1356 = vmatpush1.msra.mxu0 0.0
        %1357 = vmatprep.subr.mxu0 0.0
        %1358 = vmatpush1.msra.mxu0 0.0
        %1359 = vmatprep.subr.mxu0 0.0
        %1360 = vmatpush1.msra.mxu0 0.0
        %1361 = vmatprep.subr.mxu0 0.0
        %1362 = vmatpush1.msra.mxu0 0.0
        %1363 = vmatprep.subr.mxu0 0.0
        %1364 = vmatpush1.msra.mxu0 0.0
        %1365 = vmatprep.subr.mxu0 0.0
        %1366 = vmatpush1.msra.mxu0 0.0
        %1367 = vmatprep.subr.mxu0 0.0
        %1368 = vmatpush1.msra.mxu0 0.0
        %1369 = vmatprep.subr.mxu0 0.0
        %1370 = vmatpush1.msra.mxu0 0.0
        %1371 = vmatprep.subr.mxu0 0.0
        %1372 = vmatpush1.msra.mxu0 0.0
        %1373 = vmatprep.subr.mxu0 0.0
        %1374 = vmatpush1.msra.mxu0 0.0
        %1375 = vmatprep.subr.mxu0 0.0
        %1376 = vmatpush1.msra.mxu0 0.0
        %1377 = vmatprep.subr.mxu0 0.0
        %1378 = vmatpush1.msra.mxu0 0.0
        %1379 = vmatprep.subr.mxu0 0.0
        %1380 = vmatpush1.msra.mxu0 0.0
        %1381 = vmatprep.subr.mxu0 0.0
        %1382 = vmatpush1.msra.mxu0 0.0
        %1383 = vmatprep.subr.mxu0 0.0
        %1384 = vmatpush1.msra.mxu0 0.0
        %1385 = vmatprep.subr.mxu0 0.0
        %1386 = vmatpush1.msra.mxu0 0.0
        %1387 = vmatprep.subr.mxu0 0.0
        %1388 = vmatpush1.msra.mxu0 0.0
        %1389 = vmatprep.subr.mxu0 0.0
        %1390 = vmatpush1.msra.mxu0 0.0
        %1391 = vmatprep.subr.mxu0 0.0
        %1392 = vmatpush1.msra.mxu0 0.0
        %1393 = vmatprep.subr.mxu0 0.0
        %1394 = vmatpush1.msra.mxu0 0.0
        %1395 = vmatprep.subr.mxu0 0.0
        %1396 = vmatpush1.msra.mxu0 0.0
        %1397 = vmatprep.subr.mxu0 0.0
        %1398 = vmatpush1.msra.mxu0 0.0
        %1399 = vmatprep.subr.mxu0 0.0
        %1400 = vmatpush1.msra.mxu0 0.0
        %1401 = vmatprep.subr.mxu0 0.0
        %1402 = vmatpush1.msra.mxu0 0.0
        %1403 = vmatprep.subr.mxu0 0.0
        %1404 = vmatpush1.msra.mxu0 0.0
        %1405 = vmatprep.subr.mxu0 0.0
        %1406 = vmatpush1.msra.mxu0 0.0
        %1407 = vmatprep.mubr.f32.mxu0 0.0
        %v1408 = vand.u32 %v183, 4294901760
        %1409 = vmatmul.mubr.f32.gmra.mrb[0].mxu0 %v1408
        %v1410 = vpop.f32.mrb[0].mxu0
        %v1411 = vadd.f32 %v1318, %v1410
        %v1412 = vpop.f32.mrb[0].mxu0
        %1413 = vmatprep.mubr.f32.mxu0 0.0
        %v1414 = vand.u32 %v186, 4294901760
        %1415 = vmatmul.mubr.f32.gmra.mrb[0].mxu0 %v1414
        %v1416 = vpop.f32.mrb[0].mxu0
        %v1417 = vadd.f32 %v1324, %v1416
        %v1418 = vpop.f32.mrb[0].mxu0
        %1419 = vmatprep.mubr.f32.mxu0 0.0
        %v1420 = vand.u32 %v189, 4294901760
        %1421 = vmatmul.mubr.f32.gmra.mrb[0].mxu0 %v1420
        %v1422 = vpop.f32.mrb[0].mxu0
        %v1423 = vadd.f32 %v1330, %v1422
        %v1424 = vpop.f32.mrb[0].mxu0
        %1425 = vmatprep.mubr.f32.mxu0 0.0
        %v1426 = vand.u32 %v192, 4294901760
        %1427 = vmatmul.mubr.f32.gmra.mrb[0].mxu0 %v1426
        %v1428 = vpop.f32.mrb[0].mxu0
        %v1429 = vadd.f32 %v1336, %v1428
        %v1430 = vpop.f32.mrb[0].mxu0
        %1431 = vdwg.mxu0
        %s1432 = scalar_lea.vmem %s161, 32 [#allocation2]
        %1433 = vst.msk [vmem:[%s1432] sm:$0xff] %vm808, %v1411
        %1434 = vst.msk [vmem:[%s1432 + $0x8] sm:$0xff] %vm808, %v1417
        %1435 = vst.msk [vmem:[%s1432 + $0x10] sm:$0xff] %vm808, %v1423
        %1436 = vst.msk [vmem:[%s1432 + $0x18] sm:$0xff] %vm808, %v1429
        %s1437 = scalar_lea.vmem %s0, 64
        %v1438 = vld [vmem:[%s1437] sm:$0xff]
        %v1439 = vld [vmem:[%s1437 + $0x8] sm:$0xff]
        %v1440 = vld [vmem:[%s1437 + $0x10] sm:$0xff]
        %v1441 = vld [vmem:[%s1437 + $0x18] sm:$0xff]
        %1442 = vmatprep.subr.mxu0 0.0
        %v1443 = vand.u32 %v1438, 4294901760
        %1444 = vmatpush1.msra.mxu0 %v1443
        %1445 = vmatprep.subr.mxu0 0.0
        %v1446 = vand.u32 %v1439, 4294901760
        %1447 = vmatpush1.msra.mxu0 %v1446
        %1448 = vmatprep.subr.mxu0 0.0
        %v1449 = vand.u32 %v1440, 4294901760
        %1450 = vmatpush1.msra.mxu0 %v1449
        %1451 = vmatprep.subr.mxu0 0.0
        %v1452 = vand.u32 %v1441, 4294901760
        %1453 = vmatpush1.msra.mxu0 %v1452
        %1454 = vmatprep.subr.mxu0 0.0
        %1455 = vmatpush1.msra.mxu0 0.0
        %1456 = vmatprep.subr.mxu0 0.0
        %1457 = vmatpush1.msra.mxu0 0.0
        %1458 = vmatprep.subr.mxu0 0.0
        %1459 = vmatpush1.msra.mxu0 0.0
        %1460 = vmatprep.subr.mxu0 0.0
        %1461 = vmatpush1.msra.mxu0 0.0
        %1462 = vmatprep.subr.mxu0 0.0
        %1463 = vmatpush1.msra.mxu0 0.0
        %1464 = vmatprep.subr.mxu0 0.0
        %1465 = vmatpush1.msra.mxu0 0.0
        %1466 = vmatprep.subr.mxu0 0.0
        %1467 = vmatpush1.msra.mxu0 0.0
        %1468 = vmatprep.subr.mxu0 0.0
        %1469 = vmatpush1.msra.mxu0 0.0
        %1470 = vmatprep.subr.mxu0 0.0
        %1471 = vmatpush1.msra.mxu0 0.0
        %1472 = vmatprep.subr.mxu0 0.0
        %1473 = vmatpush1.msra.mxu0 0.0
        %1474 = vmatprep.subr.mxu0 0.0
        %1475 = vmatpush1.msra.mxu0 0.0
        %1476 = vmatprep.subr.mxu0 0.0
        %1477 = vmatpush1.msra.mxu0 0.0
        %1478 = vmatprep.subr.mxu0 0.0
        %1479 = vmatpush1.msra.mxu0 0.0
        %1480 = vmatprep.subr.mxu0 0.0
        %1481 = vmatpush1.msra.mxu0 0.0
        %1482 = vmatprep.subr.mxu0 0.0
        %1483 = vmatpush1.msra.mxu0 0.0
        %1484 = vmatprep.subr.mxu0 0.0
        %1485 = vmatpush1.msra.mxu0 0.0
        %1486 = vmatprep.subr.mxu0 0.0
        %1487 = vmatpush1.msra.mxu0 0.0
        %1488 = vmatprep.subr.mxu0 0.0
        %1489 = vmatpush1.msra.mxu0 0.0
        %1490 = vmatprep.subr.mxu0 0.0
        %1491 = vmatpush1.msra.mxu0 0.0
        %1492 = vmatprep.subr.mxu0 0.0
        %1493 = vmatpush1.msra.mxu0 0.0
        %1494 = vmatprep.subr.mxu0 0.0
        %1495 = vmatpush1.msra.mxu0 0.0
        %1496 = vmatprep.subr.mxu0 0.0
        %1497 = vmatpush1.msra.mxu0 0.0
        %1498 = vmatprep.subr.mxu0 0.0
        %1499 = vmatpush1.msra.mxu0 0.0
        %1500 = vmatprep.subr.mxu0 0.0
        %1501 = vmatpush1.msra.mxu0 0.0
        %1502 = vmatprep.subr.mxu0 0.0
        %1503 = vmatpush1.msra.mxu0 0.0
        %1504 = vmatprep.subr.mxu0 0.0
        %1505 = vmatpush1.msra.mxu0 0.0
        %1506 = vmatprep.subr.mxu0 0.0
        %1507 = vmatpush1.msra.mxu0 0.0
        %1508 = vmatprep.subr.mxu0 0.0
        %1509 = vmatpush1.msra.mxu0 0.0
        %1510 = vmatprep.mubr.f32.mxu0 0.0
        %v1511 = vand.u32 %v183, 4294901760
        %v1512 = vsub.f32 %v183, %v1511
        %v1513 = vand.u32 %v1512, 4294901760
        %v1514 = vsub.f32 %v1512, %v1513
        %v1515 = vand.u32 %v1514, 4294901760
        %1516 = vmatmul.mubr.f32.gmra.mrb[0].mxu0 %v1515
        %v1517 = vpop.f32.mrb[0].mxu0
        %v1518 = vadd.f32 0.0, %v1517
        %v1519 = vpop.f32.mrb[0].mxu0
        %1520 = vmatprep.mubr.f32.mxu0 0.0
        %v1521 = vand.u32 %v186, 4294901760
        %v1522 = vsub.f32 %v186, %v1521
        %v1523 = vand.u32 %v1522, 4294901760
        %v1524 = vsub.f32 %v1522, %v1523
        %v1525 = vand.u32 %v1524, 4294901760
        %1526 = vmatmul.mubr.f32.gmra.mrb[0].mxu0 %v1525
        %v1527 = vpop.f32.mrb[0].mxu0
        %v1528 = vadd.f32 0.0, %v1527
        %v1529 = vpop.f32.mrb[0].mxu0
        %1530 = vmatprep.mubr.f32.mxu0 0.0
        %v1531 = vand.u32 %v189, 4294901760
        %v1532 = vsub.f32 %v189, %v1531
        %v1533 = vand.u32 %v1532, 4294901760
        %v1534 = vsub.f32 %v1532, %v1533
        %v1535 = vand.u32 %v1534, 4294901760
        %1536 = vmatmul.mubr.f32.gmra.mrb[0].mxu0 %v1535
        %v1537 = vpop.f32.mrb[0].mxu0
        %v1538 = vadd.f32 0.0, %v1537
        %v1539 = vpop.f32.mrb[0].mxu0
        %1540 = vmatprep.mubr.f32.mxu0 0.0
        %v1541 = vand.u32 %v192, 4294901760
        %v1542 = vsub.f32 %v192, %v1541
        %v1543 = vand.u32 %v1542, 4294901760
        %v1544 = vsub.f32 %v1542, %v1543
        %v1545 = vand.u32 %v1544, 4294901760
        %1546 = vmatmul.mubr.f32.gmra.mrb[0].mxu0 %v1545
        %v1547 = vpop.f32.mrb[0].mxu0
        %v1548 = vadd.f32 0.0, %v1547
        %v1549 = vpop.f32.mrb[0].mxu0
        %1550 = vdwg.mxu0
        %1551 = vmatprep.subr.mxu0 0.0
        %v1552 = vand.u32 %v1438, 4294901760
        %v1553 = vsub.f32 %v1438, %v1552
        %v1554 = vand.u32 %v1553, 4294901760
        %v1555 = vsub.f32 %v1553, %v1554
        %v1556 = vand.u32 %v1555, 4294901760
        %1557 = vmatpush1.msra.mxu0 %v1556
        %1558 = vmatprep.subr.mxu0 0.0
        %v1559 = vand.u32 %v1439, 4294901760
        %v1560 = vsub.f32 %v1439, %v1559
        %v1561 = vand.u32 %v1560, 4294901760
        %v1562 = vsub.f32 %v1560, %v1561
        %v1563 = vand.u32 %v1562, 4294901760
        %1564 = vmatpush1.msra.mxu0 %v1563
        %1565 = vmatprep.subr.mxu0 0.0
        %v1566 = vand.u32 %v1440, 4294901760
        %v1567 = vsub.f32 %v1440, %v1566
        %v1568 = vand.u32 %v1567, 4294901760
        %v1569 = vsub.f32 %v1567, %v1568
        %v1570 = vand.u32 %v1569, 4294901760
        %1571 = vmatpush1.msra.mxu0 %v1570
        %1572 = vmatprep.subr.mxu0 0.0
        %v1573 = vand.u32 %v1441, 4294901760
        %v1574 = vsub.f32 %v1441, %v1573
        %v1575 = vand.u32 %v1574, 4294901760
        %v1576 = vsub.f32 %v1574, %v1575
        %v1577 = vand.u32 %v1576, 4294901760
        %1578 = vmatpush1.msra.mxu0 %v1577
        %1579 = vmatprep.subr.mxu0 0.0
        %1580 = vmatpush1.msra.mxu0 0.0
        %1581 = vmatprep.subr.mxu0 0.0
        %1582 = vmatpush1.msra.mxu0 0.0
        %1583 = vmatprep.subr.mxu0 0.0
        %1584 = vmatpush1.msra.mxu0 0.0
        %1585 = vmatprep.subr.mxu0 0.0
        %1586 = vmatpush1.msra.mxu0 0.0
        %1587 = vmatprep.subr.mxu0 0.0
        %1588 = vmatpush1.msra.mxu0 0.0
        %1589 = vmatprep.subr.mxu0 0.0
        %1590 = vmatpush1.msra.mxu0 0.0
        %1591 = vmatprep.subr.mxu0 0.0
        %1592 = vmatpush1.msra.mxu0 0.0
        %1593 = vmatprep.subr.mxu0 0.0
        %1594 = vmatpush1.msra.mxu0 0.0
        %1595 = vmatprep.subr.mxu0 0.0
        %1596 = vmatpush1.msra.mxu0 0.0
        %1597 = vmatprep.subr.mxu0 0.0
        %1598 = vmatpush1.msra.mxu0 0.0
        %1599 = vmatprep.subr.mxu0 0.0
        %1600 = vmatpush1.msra.mxu0 0.0
        %1601 = vmatprep.subr.mxu0 0.0
        %1602 = vmatpush1.msra.mxu0 0.0
        %1603 = vmatprep.subr.mxu0 0.0
        %1604 = vmatpush1.msra.mxu0 0.0
        %1605 = vmatprep.subr.mxu0 0.0
        %1606 = vmatpush1.msra.mxu0 0.0
        %1607 = vmatprep.subr.mxu0 0.0
        %1608 = vmatpush1.msra.mxu0 0.0
        %1609 = vmatprep.subr.mxu0 0.0
        %1610 = vmatpush1.msra.mxu0 0.0
        %1611 = vmatprep.subr.mxu0 0.0
        %1612 = vmatpush1.msra.mxu0 0.0
        %1613 = vmatprep.subr.mxu0 0.0
        %1614 = vmatpush1.msra.mxu0 0.0
        %1615 = vmatprep.subr.mxu0 0.0
        %1616 = vmatpush1.msra.mxu0 0.0
        %1617 = vmatprep.subr.mxu0 0.0
        %1618 = vmatpush1.msra.mxu0 0.0
        %1619 = vmatprep.subr.mxu0 0.0
        %1620 = vmatpush1.msra.mxu0 0.0
        %1621 = vmatprep.subr.mxu0 0.0
        %1622 = vmatpush1.msra.mxu0 0.0
        %1623 = vmatprep.subr.mxu0 0.0
        %1624 = vmatpush1.msra.mxu0 0.0
        %1625 = vmatprep.subr.mxu0 0.0
        %1626 = vmatpush1.msra.mxu0 0.0
        %1627 = vmatprep.subr.mxu0 0.0
        %1628 = vmatpush1.msra.mxu0 0.0
        %1629 = vmatprep.subr.mxu0 0.0
        %1630 = vmatpush1.msra.mxu0 0.0
        %1631 = vmatprep.subr.mxu0 0.0
        %1632 = vmatpush1.msra.mxu0 0.0
        %1633 = vmatprep.subr.mxu0 0.0
        %1634 = vmatpush1.msra.mxu0 0.0
        %1635 = vmatprep.mubr.f32.mxu0 0.0
        %v1636 = vand.u32 %v183, 4294901760
        %1637 = vmatmul.mubr.f32.gmra.mrb[0].mxu0 %v1636
        %v1638 = vpop.f32.mrb[0].mxu0
        %v1639 = vadd.f32 %v1518, %v1638
        %v1640 = vpop.f32.mrb[0].mxu0
        %1641 = vmatprep.mubr.f32.mxu0 0.0
        %v1642 = vand.u32 %v186, 4294901760
        %1643 = vmatmul.mubr.f32.gmra.mrb[0].mxu0 %v1642
        %v1644 = vpop.f32.mrb[0].mxu0
        %v1645 = vadd.f32 %v1528, %v1644
        %v1646 = vpop.f32.mrb[0].mxu0
        %1647 = vmatprep.mubr.f32.mxu0 0.0
        %v1648 = vand.u32 %v189, 4294901760
        %1649 = vmatmul.mubr.f32.gmra.mrb[0].mxu0 %v1648
        %v1650 = vpop.f32.mrb[0].mxu0
        %v1651 = vadd.f32 %v1538, %v1650
        %v1652 = vpop.f32.mrb[0].mxu0
        %1653 = vmatprep.mubr.f32.mxu0 0.0
        %v1654 = vand.u32 %v192, 4294901760
        %1655 = vmatmul.mubr.f32.gmra.mrb[0].mxu0 %v1654
        %v1656 = vpop.f32.mrb[0].mxu0
        %v1657 = vadd.f32 %v1548, %v1656
        %v1658 = vpop.f32.mrb[0].mxu0
        %1659 = vdwg.mxu0
        %1660 = vmatprep.subr.mxu0 0.0
        %v1661 = vand.u32 %v1438, 4294901760
        %v1662 = vsub.f32 %v1438, %v1661
        %1663 = vmatpush1.msra.mxu0 %v1662
        %1664 = vmatprep.subr.mxu0 0.0
        %v1665 = vand.u32 %v1439, 4294901760
        %v1666 = vsub.f32 %v1439, %v1665
        %1667 = vmatpush1.msra.mxu0 %v1666
        %1668 = vmatprep.subr.mxu0 0.0
        %v1669 = vand.u32 %v1440, 4294901760
        %v1670 = vsub.f32 %v1440, %v1669
        %1671 = vmatpush1.msra.mxu0 %v1670
        %1672 = vmatprep.subr.mxu0 0.0
        %v1673 = vand.u32 %v1441, 4294901760
        %v1674 = vsub.f32 %v1441, %v1673
        %1675 = vmatpush1.msra.mxu0 %v1674
        %1676 = vmatprep.subr.mxu0 0.0
        %1677 = vmatpush1.msra.mxu0 0.0
        %1678 = vmatprep.subr.mxu0 0.0
        %1679 = vmatpush1.msra.mxu0 0.0
        %1680 = vmatprep.subr.mxu0 0.0
        %1681 = vmatpush1.msra.mxu0 0.0
        %1682 = vmatprep.subr.mxu0 0.0
        %1683 = vmatpush1.msra.mxu0 0.0
        %1684 = vmatprep.subr.mxu0 0.0
        %1685 = vmatpush1.msra.mxu0 0.0
        %1686 = vmatprep.subr.mxu0 0.0
        %1687 = vmatpush1.msra.mxu0 0.0
        %1688 = vmatprep.subr.mxu0 0.0
        %1689 = vmatpush1.msra.mxu0 0.0
        %1690 = vmatprep.subr.mxu0 0.0
        %1691 = vmatpush1.msra.mxu0 0.0
        %1692 = vmatprep.subr.mxu0 0.0
        %1693 = vmatpush1.msra.mxu0 0.0
        %1694 = vmatprep.subr.mxu0 0.0
        %1695 = vmatpush1.msra.mxu0 0.0
        %1696 = vmatprep.subr.mxu0 0.0
        %1697 = vmatpush1.msra.mxu0 0.0
        %1698 = vmatprep.subr.mxu0 0.0
        %1699 = vmatpush1.msra.mxu0 0.0
        %1700 = vmatprep.subr.mxu0 0.0
        %1701 = vmatpush1.msra.mxu0 0.0
        %1702 = vmatprep.subr.mxu0 0.0
        %1703 = vmatpush1.msra.mxu0 0.0
        %1704 = vmatprep.subr.mxu0 0.0
        %1705 = vmatpush1.msra.mxu0 0.0
        %1706 = vmatprep.subr.mxu0 0.0
        %1707 = vmatpush1.msra.mxu0 0.0
        %1708 = vmatprep.subr.mxu0 0.0
        %1709 = vmatpush1.msra.mxu0 0.0
        %1710 = vmatprep.subr.mxu0 0.0
        %1711 = vmatpush1.msra.mxu0 0.0
        %1712 = vmatprep.subr.mxu0 0.0
        %1713 = vmatpush1.msra.mxu0 0.0
        %1714 = vmatprep.subr.mxu0 0.0
        %1715 = vmatpush1.msra.mxu0 0.0
        %1716 = vmatprep.subr.mxu0 0.0
        %1717 = vmatpush1.msra.mxu0 0.0
        %1718 = vmatprep.subr.mxu0 0.0
        %1719 = vmatpush1.msra.mxu0 0.0
        %1720 = vmatprep.subr.mxu0 0.0
        %1721 = vmatpush1.msra.mxu0 0.0
        %1722 = vmatprep.subr.mxu0 0.0
        %1723 = vmatpush1.msra.mxu0 0.0
        %1724 = vmatprep.subr.mxu0 0.0
        %1725 = vmatpush1.msra.mxu0 0.0
        %1726 = vmatprep.subr.mxu0 0.0
        %1727 = vmatpush1.msra.mxu0 0.0
        %1728 = vmatprep.subr.mxu0 0.0
        %1729 = vmatpush1.msra.mxu0 0.0
        %1730 = vmatprep.subr.mxu0 0.0
        %1731 = vmatpush1.msra.mxu0 0.0
        %1732 = vmatprep.mubr.f32.mxu0 0.0
        %v1733 = vand.u32 %v183, 4294901760
        %v1734 = vsub.f32 %v183, %v1733
        %1735 = vmatmul.mubr.f32.gmra.mrb[0].mxu0 %v1734
        %v1736 = vpop.f32.mrb[0].mxu0
        %v1737 = vadd.f32 %v1639, %v1736
        %v1738 = vpop.f32.mrb[0].mxu0
        %1739 = vmatprep.mubr.f32.mxu0 0.0
        %v1740 = vand.u32 %v186, 4294901760
        %v1741 = vsub.f32 %v186, %v1740
        %1742 = vmatmul.mubr.f32.gmra.mrb[0].mxu0 %v1741
        %v1743 = vpop.f32.mrb[0].mxu0
        %v1744 = vadd.f32 %v1645, %v1743
        %v1745 = vpop.f32.mrb[0].mxu0
        %1746 = vmatprep.mubr.f32.mxu0 0.0
        %v1747 = vand.u32 %v189, 4294901760
        %v1748 = vsub.f32 %v189, %v1747
        %1749 = vmatmul.mubr.f32.gmra.mrb[0].mxu0 %v1748
        %v1750 = vpop.f32.mrb[0].mxu0
        %v1751 = vadd.f32 %v1651, %v1750
        %v1752 = vpop.f32.mrb[0].mxu0
        %1753 = vmatprep.mubr.f32.mxu0 0.0
        %v1754 = vand.u32 %v192, 4294901760
        %v1755 = vsub.f32 %v192, %v1754
        %1756 = vmatmul.mubr.f32.gmra.mrb[0].mxu0 %v1755
        %v1757 = vpop.f32.mrb[0].mxu0
        %v1758 = vadd.f32 %v1657, %v1757
        %v1759 = vpop.f32.mrb[0].mxu0
        %1760 = vdwg.mxu0
        %1761 = vmatprep.subr.mxu0 0.0
        %v1762 = vand.u32 %v1438, 4294901760
        %1763 = vmatpush1.msra.mxu0 %v1762
        %1764 = vmatprep.subr.mxu0 0.0
        %v1765 = vand.u32 %v1439, 4294901760
        %1766 = vmatpush1.msra.mxu0 %v1765
        %1767 = vmatprep.subr.mxu0 0.0
        %v1768 = vand.u32 %v1440, 4294901760
        %1769 = vmatpush1.msra.mxu0 %v1768
        %1770 = vmatprep.subr.mxu0 0.0
        %v1771 = vand.u32 %v1441, 4294901760
        %1772 = vmatpush1.msra.mxu0 %v1771
        %1773 = vmatprep.subr.mxu0 0.0
        %1774 = vmatpush1.msra.mxu0 0.0
        %1775 = vmatprep.subr.mxu0 0.0
        %1776 = vmatpush1.msra.mxu0 0.0
        %1777 = vmatprep.subr.mxu0 0.0
        %1778 = vmatpush1.msra.mxu0 0.0
        %1779 = vmatprep.subr.mxu0 0.0
        %1780 = vmatpush1.msra.mxu0 0.0
        %1781 = vmatprep.subr.mxu0 0.0
        %1782 = vmatpush1.msra.mxu0 0.0
        %1783 = vmatprep.subr.mxu0 0.0
        %1784 = vmatpush1.msra.mxu0 0.0
        %1785 = vmatprep.subr.mxu0 0.0
        %1786 = vmatpush1.msra.mxu0 0.0
        %1787 = vmatprep.subr.mxu0 0.0
        %1788 = vmatpush1.msra.mxu0 0.0
        %1789 = vmatprep.subr.mxu0 0.0
        %1790 = vmatpush1.msra.mxu0 0.0
        %1791 = vmatprep.subr.mxu0 0.0
        %1792 = vmatpush1.msra.mxu0 0.0
        %1793 = vmatprep.subr.mxu0 0.0
        %1794 = vmatpush1.msra.mxu0 0.0
        %1795 = vmatprep.subr.mxu0 0.0
        %1796 = vmatpush1.msra.mxu0 0.0
        %1797 = vmatprep.subr.mxu0 0.0
        %1798 = vmatpush1.msra.mxu0 0.0
        %1799 = vmatprep.subr.mxu0 0.0
        %1800 = vmatpush1.msra.mxu0 0.0
        %1801 = vmatprep.subr.mxu0 0.0
        %1802 = vmatpush1.msra.mxu0 0.0
        %1803 = vmatprep.subr.mxu0 0.0
        %1804 = vmatpush1.msra.mxu0 0.0
        %1805 = vmatprep.subr.mxu0 0.0
        %1806 = vmatpush1.msra.mxu0 0.0
        %1807 = vmatprep.subr.mxu0 0.0
        %1808 = vmatpush1.msra.mxu0 0.0
        %1809 = vmatprep.subr.mxu0 0.0
        %1810 = vmatpush1.msra.mxu0 0.0
        %1811 = vmatprep.subr.mxu0 0.0
        %1812 = vmatpush1.msra.mxu0 0.0
        %1813 = vmatprep.subr.mxu0 0.0
        %1814 = vmatpush1.msra.mxu0 0.0
        %1815 = vmatprep.subr.mxu0 0.0
        %1816 = vmatpush1.msra.mxu0 0.0
        %1817 = vmatprep.subr.mxu0 0.0
        %1818 = vmatpush1.msra.mxu0 0.0
        %1819 = vmatprep.subr.mxu0 0.0
        %1820 = vmatpush1.msra.mxu0 0.0
        %1821 = vmatprep.subr.mxu0 0.0
        %1822 = vmatpush1.msra.mxu0 0.0
        %1823 = vmatprep.subr.mxu0 0.0
        %1824 = vmatpush1.msra.mxu0 0.0
        %1825 = vmatprep.subr.mxu0 0.0
        %1826 = vmatpush1.msra.mxu0 0.0
        %1827 = vmatprep.subr.mxu0 0.0
        %1828 = vmatpush1.msra.mxu0 0.0
        %1829 = vmatprep.mubr.f32.mxu0 0.0
        %v1830 = vand.u32 %v183, 4294901760
        %v1831 = vsub.f32 %v183, %v1830
        %v1832 = vand.u32 %v1831, 4294901760
        %1833 = vmatmul.mubr.f32.gmra.mrb[0].mxu0 %v1832
        %v1834 = vpop.f32.mrb[0].mxu0
        %v1835 = vadd.f32 %v1737, %v1834
        %v1836 = vpop.f32.mrb[0].mxu0
        %1837 = vmatprep.mubr.f32.mxu0 0.0
        %v1838 = vand.u32 %v186, 4294901760
        %v1839 = vsub.f32 %v186, %v1838
        %v1840 = vand.u32 %v1839, 4294901760
        %1841 = vmatmul.mubr.f32.gmra.mrb[0].mxu0 %v1840
        %v1842 = vpop.f32.mrb[0].mxu0
        %v1843 = vadd.f32 %v1744, %v1842
        %v1844 = vpop.f32.mrb[0].mxu0
        %1845 = vmatprep.mubr.f32.mxu0 0.0
        %v1846 = vand.u32 %v189, 4294901760
        %v1847 = vsub.f32 %v189, %v1846
        %v1848 = vand.u32 %v1847, 4294901760
        %1849 = vmatmul.mubr.f32.gmra.mrb[0].mxu0 %v1848
        %v1850 = vpop.f32.mrb[0].mxu0
        %v1851 = vadd.f32 %v1751, %v1850
        %v1852 = vpop.f32.mrb[0].mxu0
        %1853 = vmatprep.mubr.f32.mxu0 0.0
        %v1854 = vand.u32 %v192, 4294901760
        %v1855 = vsub.f32 %v192, %v1854
        %v1856 = vand.u32 %v1855, 4294901760
        %1857 = vmatmul.mubr.f32.gmra.mrb[0].mxu0 %v1856
        %v1858 = vpop.f32.mrb[0].mxu0
        %v1859 = vadd.f32 %v1758, %v1858
        %v1860 = vpop.f32.mrb[0].mxu0
        %1861 = vdwg.mxu0
        %1862 = vmatprep.subr.mxu0 0.0
        %v1863 = vand.u32 %v1438, 4294901760
        %v1864 = vsub.f32 %v1438, %v1863
        %v1865 = vand.u32 %v1864, 4294901760
        %1866 = vmatpush1.msra.mxu0 %v1865
        %1867 = vmatprep.subr.mxu0 0.0
        %v1868 = vand.u32 %v1439, 4294901760
        %v1869 = vsub.f32 %v1439, %v1868
        %v1870 = vand.u32 %v1869, 4294901760
        %1871 = vmatpush1.msra.mxu0 %v1870
        %1872 = vmatprep.subr.mxu0 0.0
        %v1873 = vand.u32 %v1440, 4294901760
        %v1874 = vsub.f32 %v1440, %v1873
        %v1875 = vand.u32 %v1874, 4294901760
        %1876 = vmatpush1.msra.mxu0 %v1875
        %1877 = vmatprep.subr.mxu0 0.0
        %v1878 = vand.u32 %v1441, 4294901760
        %v1879 = vsub.f32 %v1441, %v1878
        %v1880 = vand.u32 %v1879, 4294901760
        %1881 = vmatpush1.msra.mxu0 %v1880
        %1882 = vmatprep.subr.mxu0 0.0
        %1883 = vmatpush1.msra.mxu0 0.0
        %1884 = vmatprep.subr.mxu0 0.0
        %1885 = vmatpush1.msra.mxu0 0.0
        %1886 = vmatprep.subr.mxu0 0.0
        %1887 = vmatpush1.msra.mxu0 0.0
        %1888 = vmatprep.subr.mxu0 0.0
        %1889 = vmatpush1.msra.mxu0 0.0
        %1890 = vmatprep.subr.mxu0 0.0
        %1891 = vmatpush1.msra.mxu0 0.0
        %1892 = vmatprep.subr.mxu0 0.0
        %1893 = vmatpush1.msra.mxu0 0.0
        %1894 = vmatprep.subr.mxu0 0.0
        %1895 = vmatpush1.msra.mxu0 0.0
        %1896 = vmatprep.subr.mxu0 0.0
        %1897 = vmatpush1.msra.mxu0 0.0
        %1898 = vmatprep.subr.mxu0 0.0
        %1899 = vmatpush1.msra.mxu0 0.0
        %1900 = vmatprep.subr.mxu0 0.0
        %1901 = vmatpush1.msra.mxu0 0.0
        %1902 = vmatprep.subr.mxu0 0.0
        %1903 = vmatpush1.msra.mxu0 0.0
        %1904 = vmatprep.subr.mxu0 0.0
        %1905 = vmatpush1.msra.mxu0 0.0
        %1906 = vmatprep.subr.mxu0 0.0
        %1907 = vmatpush1.msra.mxu0 0.0
        %1908 = vmatprep.subr.mxu0 0.0
        %1909 = vmatpush1.msra.mxu0 0.0
        %1910 = vmatprep.subr.mxu0 0.0
        %1911 = vmatpush1.msra.mxu0 0.0
        %1912 = vmatprep.subr.mxu0 0.0
        %1913 = vmatpush1.msra.mxu0 0.0
        %1914 = vmatprep.subr.mxu0 0.0
        %1915 = vmatpush1.msra.mxu0 0.0
        %1916 = vmatprep.subr.mxu0 0.0
        %1917 = vmatpush1.msra.mxu0 0.0
        %1918 = vmatprep.subr.mxu0 0.0
        %1919 = vmatpush1.msra.mxu0 0.0
        %1920 = vmatprep.subr.mxu0 0.0
        %1921 = vmatpush1.msra.mxu0 0.0
        %1922 = vmatprep.subr.mxu0 0.0
        %1923 = vmatpush1.msra.mxu0 0.0
        %1924 = vmatprep.subr.mxu0 0.0
        %1925 = vmatpush1.msra.mxu0 0.0
        %1926 = vmatprep.subr.mxu0 0.0
        %1927 = vmatpush1.msra.mxu0 0.0
        %1928 = vmatprep.subr.mxu0 0.0
        %1929 = vmatpush1.msra.mxu0 0.0
        %1930 = vmatprep.subr.mxu0 0.0
        %1931 = vmatpush1.msra.mxu0 0.0
        %1932 = vmatprep.subr.mxu0 0.0
        %1933 = vmatpush1.msra.mxu0 0.0
        %1934 = vmatprep.subr.mxu0 0.0
        %1935 = vmatpush1.msra.mxu0 0.0
        %1936 = vmatprep.subr.mxu0 0.0
        %1937 = vmatpush1.msra.mxu0 0.0
        %1938 = vmatprep.mubr.f32.mxu0 0.0
        %v1939 = vand.u32 %v183, 4294901760
        %1940 = vmatmul.mubr.f32.gmra.mrb[0].mxu0 %v1939
        %v1941 = vpop.f32.mrb[0].mxu0
        %v1942 = vadd.f32 %v1835, %v1941
        %v1943 = vpop.f32.mrb[0].mxu0
        %1944 = vmatprep.mubr.f32.mxu0 0.0
        %v1945 = vand.u32 %v186, 4294901760
        %1946 = vmatmul.mubr.f32.gmra.mrb[0].mxu0 %v1945
        %v1947 = vpop.f32.mrb[0].mxu0
        %v1948 = vadd.f32 %v1843, %v1947
        %v1949 = vpop.f32.mrb[0].mxu0
        %1950 = vmatprep.mubr.f32.mxu0 0.0
        %v1951 = vand.u32 %v189, 4294901760
        %1952 = vmatmul.mubr.f32.gmra.mrb[0].mxu0 %v1951
        %v1953 = vpop.f32.mrb[0].mxu0
        %v1954 = vadd.f32 %v1851, %v1953
        %v1955 = vpop.f32.mrb[0].mxu0
        %1956 = vmatprep.mubr.f32.mxu0 0.0
        %v1957 = vand.u32 %v192, 4294901760
        %1958 = vmatmul.mubr.f32.gmra.mrb[0].mxu0 %v1957
        %v1959 = vpop.f32.mrb[0].mxu0
        %v1960 = vadd.f32 %v1859, %v1959
        %v1961 = vpop.f32.mrb[0].mxu0
        %1962 = vdwg.mxu0
        %1963 = vmatprep.subr.mxu0 0.0
        %v1964 = vand.u32 %v1438, 4294901760
        %1965 = vmatpush1.msra.mxu0 %v1964
        %1966 = vmatprep.subr.mxu0 0.0
        %v1967 = vand.u32 %v1439, 4294901760
        %1968 = vmatpush1.msra.mxu0 %v1967
        %1969 = vmatprep.subr.mxu0 0.0
        %v1970 = vand.u32 %v1440, 4294901760
        %1971 = vmatpush1.msra.mxu0 %v1970
        %1972 = vmatprep.subr.mxu0 0.0
        %v1973 = vand.u32 %v1441, 4294901760
        %1974 = vmatpush1.msra.mxu0 %v1973
        %1975 = vmatprep.subr.mxu0 0.0
        %1976 = vmatpush1.msra.mxu0 0.0
        %1977 = vmatprep.subr.mxu0 0.0
        %1978 = vmatpush1.msra.mxu0 0.0
        %1979 = vmatprep.subr.mxu0 0.0
        %1980 = vmatpush1.msra.mxu0 0.0
        %1981 = vmatprep.subr.mxu0 0.0
        %1982 = vmatpush1.msra.mxu0 0.0
        %1983 = vmatprep.subr.mxu0 0.0
        %1984 = vmatpush1.msra.mxu0 0.0
        %1985 = vmatprep.subr.mxu0 0.0
        %1986 = vmatpush1.msra.mxu0 0.0
        %1987 = vmatprep.subr.mxu0 0.0
        %1988 = vmatpush1.msra.mxu0 0.0
        %1989 = vmatprep.subr.mxu0 0.0
        %1990 = vmatpush1.msra.mxu0 0.0
        %1991 = vmatprep.subr.mxu0 0.0
        %1992 = vmatpush1.msra.mxu0 0.0
        %1993 = vmatprep.subr.mxu0 0.0
        %1994 = vmatpush1.msra.mxu0 0.0
        %1995 = vmatprep.subr.mxu0 0.0
        %1996 = vmatpush1.msra.mxu0 0.0
        %1997 = vmatprep.subr.mxu0 0.0
        %1998 = vmatpush1.msra.mxu0 0.0
        %1999 = vmatprep.subr.mxu0 0.0
        %2000 = vmatpush1.msra.mxu0 0.0
        %2001 = vmatprep.subr.mxu0 0.0
        %2002 = vmatpush1.msra.mxu0 0.0
        %2003 = vmatprep.subr.mxu0 0.0
        %2004 = vmatpush1.msra.mxu0 0.0
        %2005 = vmatprep.subr.mxu0 0.0
        %2006 = vmatpush1.msra.mxu0 0.0
        %2007 = vmatprep.subr.mxu0 0.0
        %2008 = vmatpush1.msra.mxu0 0.0
        %2009 = vmatprep.subr.mxu0 0.0
        %2010 = vmatpush1.msra.mxu0 0.0
        %2011 = vmatprep.subr.mxu0 0.0
        %2012 = vmatpush1.msra.mxu0 0.0
        %2013 = vmatprep.subr.mxu0 0.0
        %2014 = vmatpush1.msra.mxu0 0.0
        %2015 = vmatprep.subr.mxu0 0.0
        %2016 = vmatpush1.msra.mxu0 0.0
        %2017 = vmatprep.subr.mxu0 0.0
        %2018 = vmatpush1.msra.mxu0 0.0
        %2019 = vmatprep.subr.mxu0 0.0
        %2020 = vmatpush1.msra.mxu0 0.0
        %2021 = vmatprep.subr.mxu0 0.0
        %2022 = vmatpush1.msra.mxu0 0.0
        %2023 = vmatprep.subr.mxu0 0.0
        %2024 = vmatpush1.msra.mxu0 0.0
        %2025 = vmatprep.subr.mxu0 0.0
        %2026 = vmatpush1.msra.mxu0 0.0
        %2027 = vmatprep.subr.mxu0 0.0
        %2028 = vmatpush1.msra.mxu0 0.0
        %2029 = vmatprep.subr.mxu0 0.0
        %2030 = vmatpush1.msra.mxu0 0.0
        %2031 = vmatprep.mubr.f32.mxu0 0.0
        %v2032 = vand.u32 %v183, 4294901760
        %2033 = vmatmul.mubr.f32.gmra.mrb[0].mxu0 %v2032
        %v2034 = vpop.f32.mrb[0].mxu0
        %v2035 = vadd.f32 %v1942, %v2034
        %v2036 = vpop.f32.mrb[0].mxu0
        %2037 = vmatprep.mubr.f32.mxu0 0.0
        %v2038 = vand.u32 %v186, 4294901760
        %2039 = vmatmul.mubr.f32.gmra.mrb[0].mxu0 %v2038
        %v2040 = vpop.f32.mrb[0].mxu0
        %v2041 = vadd.f32 %v1948, %v2040
        %v2042 = vpop.f32.mrb[0].mxu0
        %2043 = vmatprep.mubr.f32.mxu0 0.0
        %v2044 = vand.u32 %v189, 4294901760
        %2045 = vmatmul.mubr.f32.gmra.mrb[0].mxu0 %v2044
        %v2046 = vpop.f32.mrb[0].mxu0
        %v2047 = vadd.f32 %v1954, %v2046
        %v2048 = vpop.f32.mrb[0].mxu0
        %2049 = vmatprep.mubr.f32.mxu0 0.0
        %v2050 = vand.u32 %v192, 4294901760
        %2051 = vmatmul.mubr.f32.gmra.mrb[0].mxu0 %v2050
        %v2052 = vpop.f32.mrb[0].mxu0
        %v2053 = vadd.f32 %v1960, %v2052
        %v2054 = vpop.f32.mrb[0].mxu0
        %2055 = vdwg.mxu0
        %s2056 = scalar_lea.vmem %s161, 64 [#allocation2]
        %2057 = vst.msk [vmem:[%s2056] sm:$0xff] %vm808, %v2035
        %2058 = vst.msk [vmem:[%s2056 + $0x8] sm:$0xff] %vm808, %v2041
        %2059 = vst.msk [vmem:[%s2056 + $0x10] sm:$0xff] %vm808, %v2047
        %2060 = vst.msk [vmem:[%s2056 + $0x18] sm:$0xff] %vm808, %v2053
        %s2061 = scalar_lea.vmem %s0, 96
        %v2062 = vld [vmem:[%s2061] sm:$0xff]
        %v2063 = vld [vmem:[%s2061 + $0x8] sm:$0xff]
        %v2064 = vld [vmem:[%s2061 + $0x10] sm:$0xff]
        %v2065 = vld [vmem:[%s2061 + $0x18] sm:$0xff]
        %2066 = vmatprep.subr.mxu0 0.0
        %v2067 = vand.u32 %v2062, 4294901760
        %2068 = vmatpush1.msra.mxu0 %v2067
        %2069 = vmatprep.subr.mxu0 0.0
        %v2070 = vand.u32 %v2063, 4294901760
        %2071 = vmatpush1.msra.mxu0 %v2070
        %2072 = vmatprep.subr.mxu0 0.0
        %v2073 = vand.u32 %v2064, 4294901760
        %2074 = vmatpush1.msra.mxu0 %v2073
        %2075 = vmatprep.subr.mxu0 0.0
        %v2076 = vand.u32 %v2065, 4294901760
        %2077 = vmatpush1.msra.mxu0 %v2076
        %2078 = vmatprep.subr.mxu0 0.0
        %2079 = vmatpush1.msra.mxu0 0.0
        %2080 = vmatprep.subr.mxu0 0.0
        %2081 = vmatpush1.msra.mxu0 0.0
        %2082 = vmatprep.subr.mxu0 0.0
        %2083 = vmatpush1.msra.mxu0 0.0
        %2084 = vmatprep.subr.mxu0 0.0
        %2085 = vmatpush1.msra.mxu0 0.0
        %2086 = vmatprep.subr.mxu0 0.0
        %2087 = vmatpush1.msra.mxu0 0.0
        %2088 = vmatprep.subr.mxu0 0.0
        %2089 = vmatpush1.msra.mxu0 0.0
        %2090 = vmatprep.subr.mxu0 0.0
        %2091 = vmatpush1.msra.mxu0 0.0
        %2092 = vmatprep.subr.mxu0 0.0
        %2093 = vmatpush1.msra.mxu0 0.0
        %2094 = vmatprep.subr.mxu0 0.0
        %2095 = vmatpush1.msra.mxu0 0.0
        %2096 = vmatprep.subr.mxu0 0.0
        %2097 = vmatpush1.msra.mxu0 0.0
        %2098 = vmatprep.subr.mxu0 0.0
        %2099 = vmatpush1.msra.mxu0 0.0
        %2100 = vmatprep.subr.mxu0 0.0
        %2101 = vmatpush1.msra.mxu0 0.0
        %2102 = vmatprep.subr.mxu0 0.0
        %2103 = vmatpush1.msra.mxu0 0.0
        %2104 = vmatprep.subr.mxu0 0.0
        %2105 = vmatpush1.msra.mxu0 0.0
        %2106 = vmatprep.subr.mxu0 0.0
        %2107 = vmatpush1.msra.mxu0 0.0
        %2108 = vmatprep.subr.mxu0 0.0
        %2109 = vmatpush1.msra.mxu0 0.0
        %2110 = vmatprep.subr.mxu0 0.0
        %2111 = vmatpush1.msra.mxu0 0.0
        %2112 = vmatprep.subr.mxu0 0.0
        %2113 = vmatpush1.msra.mxu0 0.0
        %2114 = vmatprep.subr.mxu0 0.0
        %2115 = vmatpush1.msra.mxu0 0.0
        %2116 = vmatprep.subr.mxu0 0.0
        %2117 = vmatpush1.msra.mxu0 0.0
        %2118 = vmatprep.subr.mxu0 0.0
        %2119 = vmatpush1.msra.mxu0 0.0
        %2120 = vmatprep.subr.mxu0 0.0
        %2121 = vmatpush1.msra.mxu0 0.0
        %2122 = vmatprep.subr.mxu0 0.0
        %2123 = vmatpush1.msra.mxu0 0.0
        %2124 = vmatprep.subr.mxu0 0.0
        %2125 = vmatpush1.msra.mxu0 0.0
        %2126 = vmatprep.subr.mxu0 0.0
        %2127 = vmatpush1.msra.mxu0 0.0
        %2128 = vmatprep.subr.mxu0 0.0
        %2129 = vmatpush1.msra.mxu0 0.0
        %2130 = vmatprep.subr.mxu0 0.0
        %2131 = vmatpush1.msra.mxu0 0.0
        %2132 = vmatprep.subr.mxu0 0.0
        %2133 = vmatpush1.msra.mxu0 0.0
        %2134 = vmatprep.mubr.f32.mxu0 0.0
        %v2135 = vand.u32 %v183, 4294901760
        %v2136 = vsub.f32 %v183, %v2135
        %v2137 = vand.u32 %v2136, 4294901760
        %v2138 = vsub.f32 %v2136, %v2137
        %v2139 = vand.u32 %v2138, 4294901760
        %2140 = vmatmul.mubr.f32.gmra.mrb[0].mxu0 %v2139
        %v2141 = vpop.f32.mrb[0].mxu0
        %v2142 = vadd.f32 0.0, %v2141
        %v2143 = vpop.f32.mrb[0].mxu0
        %2144 = vmatprep.mubr.f32.mxu0 0.0
        %v2145 = vand.u32 %v186, 4294901760
        %v2146 = vsub.f32 %v186, %v2145
        %v2147 = vand.u32 %v2146, 4294901760
        %v2148 = vsub.f32 %v2146, %v2147
        %v2149 = vand.u32 %v2148, 4294901760
        %2150 = vmatmul.mubr.f32.gmra.mrb[0].mxu0 %v2149
        %v2151 = vpop.f32.mrb[0].mxu0
        %v2152 = vadd.f32 0.0, %v2151
        %v2153 = vpop.f32.mrb[0].mxu0
        %2154 = vmatprep.mubr.f32.mxu0 0.0
        %v2155 = vand.u32 %v189, 4294901760
        %v2156 = vsub.f32 %v189, %v2155
        %v2157 = vand.u32 %v2156, 4294901760
        %v2158 = vsub.f32 %v2156, %v2157
        %v2159 = vand.u32 %v2158, 4294901760
        %2160 = vmatmul.mubr.f32.gmra.mrb[0].mxu0 %v2159
        %v2161 = vpop.f32.mrb[0].mxu0
        %v2162 = vadd.f32 0.0, %v2161
        %v2163 = vpop.f32.mrb[0].mxu0
        %2164 = vmatprep.mubr.f32.mxu0 0.0
        %v2165 = vand.u32 %v192, 4294901760
        %v2166 = vsub.f32 %v192, %v2165
        %v2167 = vand.u32 %v2166, 4294901760
        %v2168 = vsub.f32 %v2166, %v2167
        %v2169 = vand.u32 %v2168, 4294901760
        %2170 = vmatmul.mubr.f32.gmra.mrb[0].mxu0 %v2169
        %v2171 = vpop.f32.mrb[0].mxu0
        %v2172 = vadd.f32 0.0, %v2171
        %v2173 = vpop.f32.mrb[0].mxu0
        %2174 = vdwg.mxu0
        %2175 = vmatprep.subr.mxu0 0.0
        %v2176 = vand.u32 %v2062, 4294901760
        %v2177 = vsub.f32 %v2062, %v2176
        %v2178 = vand.u32 %v2177, 4294901760
        %v2179 = vsub.f32 %v2177, %v2178
        %v2180 = vand.u32 %v2179, 4294901760
        %2181 = vmatpush1.msra.mxu0 %v2180
        %2182 = vmatprep.subr.mxu0 0.0
        %v2183 = vand.u32 %v2063, 4294901760
        %v2184 = vsub.f32 %v2063, %v2183
        %v2185 = vand.u32 %v2184, 4294901760
        %v2186 = vsub.f32 %v2184, %v2185
        %v2187 = vand.u32 %v2186, 4294901760
        %2188 = vmatpush1.msra.mxu0 %v2187
        %2189 = vmatprep.subr.mxu0 0.0
        %v2190 = vand.u32 %v2064, 4294901760
        %v2191 = vsub.f32 %v2064, %v2190
        %v2192 = vand.u32 %v2191, 4294901760
        %v2193 = vsub.f32 %v2191, %v2192
        %v2194 = vand.u32 %v2193, 4294901760
        %2195 = vmatpush1.msra.mxu0 %v2194
        %2196 = vmatprep.subr.mxu0 0.0
        %v2197 = vand.u32 %v2065, 4294901760
        %v2198 = vsub.f32 %v2065, %v2197
        %v2199 = vand.u32 %v2198, 4294901760
        %v2200 = vsub.f32 %v2198, %v2199
        %v2201 = vand.u32 %v2200, 4294901760
        %2202 = vmatpush1.msra.mxu0 %v2201
        %2203 = vmatprep.subr.mxu0 0.0
        %2204 = vmatpush1.msra.mxu0 0.0
        %2205 = vmatprep.subr.mxu0 0.0
        %2206 = vmatpush1.msra.mxu0 0.0
        %2207 = vmatprep.subr.mxu0 0.0
        %2208 = vmatpush1.msra.mxu0 0.0
        %2209 = vmatprep.subr.mxu0 0.0
        %2210 = vmatpush1.msra.mxu0 0.0
        %2211 = vmatprep.subr.mxu0 0.0
        %2212 = vmatpush1.msra.mxu0 0.0
        %2213 = vmatprep.subr.mxu0 0.0
        %2214 = vmatpush1.msra.mxu0 0.0
        %2215 = vmatprep.subr.mxu0 0.0
        %2216 = vmatpush1.msra.mxu0 0.0
        %2217 = vmatprep.subr.mxu0 0.0
        %2218 = vmatpush1.msra.mxu0 0.0
        %2219 = vmatprep.subr.mxu0 0.0
        %2220 = vmatpush1.msra.mxu0 0.0
        %2221 = vmatprep.subr.mxu0 0.0
        %2222 = vmatpush1.msra.mxu0 0.0
        %2223 = vmatprep.subr.mxu0 0.0
        %2224 = vmatpush1.msra.mxu0 0.0
        %2225 = vmatprep.subr.mxu0 0.0
        %2226 = vmatpush1.msra.mxu0 0.0
        %2227 = vmatprep.subr.mxu0 0.0
        %2228 = vmatpush1.msra.mxu0 0.0
        %2229 = vmatprep.subr.mxu0 0.0
        %2230 = vmatpush1.msra.mxu0 0.0
        %2231 = vmatprep.subr.mxu0 0.0
        %2232 = vmatpush1.msra.mxu0 0.0
        %2233 = vmatprep.subr.mxu0 0.0
        %2234 = vmatpush1.msra.mxu0 0.0
        %2235 = vmatprep.subr.mxu0 0.0
        %2236 = vmatpush1.msra.mxu0 0.0
        %2237 = vmatprep.subr.mxu0 0.0
        %2238 = vmatpush1.msra.mxu0 0.0
        %2239 = vmatprep.subr.mxu0 0.0
        %2240 = vmatpush1.msra.mxu0 0.0
        %2241 = vmatprep.subr.mxu0 0.0
        %2242 = vmatpush1.msra.mxu0 0.0
        %2243 = vmatprep.subr.mxu0 0.0
        %2244 = vmatpush1.msra.mxu0 0.0
        %2245 = vmatprep.subr.mxu0 0.0
        %2246 = vmatpush1.msra.mxu0 0.0
        %2247 = vmatprep.subr.mxu0 0.0
        %2248 = vmatpush1.msra.mxu0 0.0
        %2249 = vmatprep.subr.mxu0 0.0
        %2250 = vmatpush1.msra.mxu0 0.0
        %2251 = vmatprep.subr.mxu0 0.0
        %2252 = vmatpush1.msra.mxu0 0.0
        %2253 = vmatprep.subr.mxu0 0.0
        %2254 = vmatpush1.msra.mxu0 0.0
        %2255 = vmatprep.subr.mxu0 0.0
        %2256 = vmatpush1.msra.mxu0 0.0
        %2257 = vmatprep.subr.mxu0 0.0
        %2258 = vmatpush1.msra.mxu0 0.0
        %2259 = vmatprep.mubr.f32.mxu0 0.0
        %v2260 = vand.u32 %v183, 4294901760
        %2261 = vmatmul.mubr.f32.gmra.mrb[0].mxu0 %v2260
        %v2262 = vpop.f32.mrb[0].mxu0
        %v2263 = vadd.f32 %v2142, %v2262
        %v2264 = vpop.f32.mrb[0].mxu0
        %2265 = vmatprep.mubr.f32.mxu0 0.0
        %v2266 = vand.u32 %v186, 4294901760
        %2267 = vmatmul.mubr.f32.gmra.mrb[0].mxu0 %v2266
        %v2268 = vpop.f32.mrb[0].mxu0
        %v2269 = vadd.f32 %v2152, %v2268
        %v2270 = vpop.f32.mrb[0].mxu0
        %2271 = vmatprep.mubr.f32.mxu0 0.0
        %v2272 = vand.u32 %v189, 4294901760
        %2273 = vmatmul.mubr.f32.gmra.mrb[0].mxu0 %v2272
        %v2274 = vpop.f32.mrb[0].mxu0
        %v2275 = vadd.f32 %v2162, %v2274
        %v2276 = vpop.f32.mrb[0].mxu0
        %2277 = vmatprep.mubr.f32.mxu0 0.0
        %v2278 = vand.u32 %v192, 4294901760
        %2279 = vmatmul.mubr.f32.gmra.mrb[0].mxu0 %v2278
        %v2280 = vpop.f32.mrb[0].mxu0
        %v2281 = vadd.f32 %v2172, %v2280
        %v2282 = vpop.f32.mrb[0].mxu0
        %2283 = vdwg.mxu0
        %2284 = vmatprep.subr.mxu0 0.0
        %v2285 = vand.u32 %v2062, 4294901760
        %v2286 = vsub.f32 %v2062, %v2285
        %2287 = vmatpush1.msra.mxu0 %v2286
        %2288 = vmatprep.subr.mxu0 0.0
        %v2289 = vand.u32 %v2063, 4294901760
        %v2290 = vsub.f32 %v2063, %v2289
        %2291 = vmatpush1.msra.mxu0 %v2290
        %2292 = vmatprep.subr.mxu0 0.0
        %v2293 = vand.u32 %v2064, 4294901760
        %v2294 = vsub.f32 %v2064, %v2293
        %2295 = vmatpush1.msra.mxu0 %v2294
        %2296 = vmatprep.subr.mxu0 0.0
        %v2297 = vand.u32 %v2065, 4294901760
        %v2298 = vsub.f32 %v2065, %v2297
        %2299 = vmatpush1.msra.mxu0 %v2298
        %2300 = vmatprep.subr.mxu0 0.0
        %2301 = vmatpush1.msra.mxu0 0.0
        %2302 = vmatprep.subr.mxu0 0.0
        %2303 = vmatpush1.msra.mxu0 0.0
        %2304 = vmatprep.subr.mxu0 0.0
        %2305 = vmatpush1.msra.mxu0 0.0
        %2306 = vmatprep.subr.mxu0 0.0
        %2307 = vmatpush1.msra.mxu0 0.0
        %2308 = vmatprep.subr.mxu0 0.0
        %2309 = vmatpush1.msra.mxu0 0.0
        %2310 = vmatprep.subr.mxu0 0.0
        %2311 = vmatpush1.msra.mxu0 0.0
        %2312 = vmatprep.subr.mxu0 0.0
        %2313 = vmatpush1.msra.mxu0 0.0
        %2314 = vmatprep.subr.mxu0 0.0
        %2315 = vmatpush1.msra.mxu0 0.0
        %2316 = vmatprep.subr.mxu0 0.0
        %2317 = vmatpush1.msra.mxu0 0.0
        %2318 = vmatprep.subr.mxu0 0.0
        %2319 = vmatpush1.msra.mxu0 0.0
        %2320 = vmatprep.subr.mxu0 0.0
        %2321 = vmatpush1.msra.mxu0 0.0
        %2322 = vmatprep.subr.mxu0 0.0
        %2323 = vmatpush1.msra.mxu0 0.0
        %2324 = vmatprep.subr.mxu0 0.0
        %2325 = vmatpush1.msra.mxu0 0.0
        %2326 = vmatprep.subr.mxu0 0.0
        %2327 = vmatpush1.msra.mxu0 0.0
        %2328 = vmatprep.subr.mxu0 0.0
        %2329 = vmatpush1.msra.mxu0 0.0
        %2330 = vmatprep.subr.mxu0 0.0
        %2331 = vmatpush1.msra.mxu0 0.0
        %2332 = vmatprep.subr.mxu0 0.0
        %2333 = vmatpush1.msra.mxu0 0.0
        %2334 = vmatprep.subr.mxu0 0.0
        %2335 = vmatpush1.msra.mxu0 0.0
        %2336 = vmatprep.subr.mxu0 0.0
        %2337 = vmatpush1.msra.mxu0 0.0
        %2338 = vmatprep.subr.mxu0 0.0
        %2339 = vmatpush1.msra.mxu0 0.0
        %2340 = vmatprep.subr.mxu0 0.0
        %2341 = vmatpush1.msra.mxu0 0.0
        %2342 = vmatprep.subr.mxu0 0.0
        %2343 = vmatpush1.msra.mxu0 0.0
        %2344 = vmatprep.subr.mxu0 0.0
        %2345 = vmatpush1.msra.mxu0 0.0
        %2346 = vmatprep.subr.mxu0 0.0
        %2347 = vmatpush1.msra.mxu0 0.0
        %2348 = vmatprep.subr.mxu0 0.0
        %2349 = vmatpush1.msra.mxu0 0.0
        %2350 = vmatprep.subr.mxu0 0.0
        %2351 = vmatpush1.msra.mxu0 0.0
        %2352 = vmatprep.subr.mxu0 0.0
        %2353 = vmatpush1.msra.mxu0 0.0
        %2354 = vmatprep.subr.mxu0 0.0
        %2355 = vmatpush1.msra.mxu0 0.0
        %2356 = vmatprep.mubr.f32.mxu0 0.0
        %v2357 = vand.u32 %v183, 4294901760
        %v2358 = vsub.f32 %v183, %v2357
        %2359 = vmatmul.mubr.f32.gmra.mrb[0].mxu0 %v2358
        %v2360 = vpop.f32.mrb[0].mxu0
        %v2361 = vadd.f32 %v2263, %v2360
        %v2362 = vpop.f32.mrb[0].mxu0
        %2363 = vmatprep.mubr.f32.mxu0 0.0
        %v2364 = vand.u32 %v186, 4294901760
        %v2365 = vsub.f32 %v186, %v2364
        %2366 = vmatmul.mubr.f32.gmra.mrb[0].mxu0 %v2365
        %v2367 = vpop.f32.mrb[0].mxu0
        %v2368 = vadd.f32 %v2269, %v2367
        %v2369 = vpop.f32.mrb[0].mxu0
        %2370 = vmatprep.mubr.f32.mxu0 0.0
        %v2371 = vand.u32 %v189, 4294901760
        %v2372 = vsub.f32 %v189, %v2371
        %2373 = vmatmul.mubr.f32.gmra.mrb[0].mxu0 %v2372
        %v2374 = vpop.f32.mrb[0].mxu0
        %v2375 = vadd.f32 %v2275, %v2374
        %v2376 = vpop.f32.mrb[0].mxu0
        %2377 = vmatprep.mubr.f32.mxu0 0.0
        %v2378 = vand.u32 %v192, 4294901760
        %v2379 = vsub.f32 %v192, %v2378
        %2380 = vmatmul.mubr.f32.gmra.mrb[0].mxu0 %v2379
        %v2381 = vpop.f32.mrb[0].mxu0
        %v2382 = vadd.f32 %v2281, %v2381
        %v2383 = vpop.f32.mrb[0].mxu0
        %2384 = vdwg.mxu0
        %2385 = vmatprep.subr.mxu0 0.0
        %v2386 = vand.u32 %v2062, 4294901760
        %2387 = vmatpush1.msra.mxu0 %v2386
        %2388 = vmatprep.subr.mxu0 0.0
        %v2389 = vand.u32 %v2063, 4294901760
        %2390 = vmatpush1.msra.mxu0 %v2389
        %2391 = vmatprep.subr.mxu0 0.0
        %v2392 = vand.u32 %v2064, 4294901760
        %2393 = vmatpush1.msra.mxu0 %v2392
        %2394 = vmatprep.subr.mxu0 0.0
        %v2395 = vand.u32 %v2065, 4294901760
        %2396 = vmatpush1.msra.mxu0 %v2395
        %2397 = vmatprep.subr.mxu0 0.0
        %2398 = vmatpush1.msra.mxu0 0.0
        %2399 = vmatprep.subr.mxu0 0.0
        %2400 = vmatpush1.msra.mxu0 0.0
        %2401 = vmatprep.subr.mxu0 0.0
        %2402 = vmatpush1.msra.mxu0 0.0
        %2403 = vmatprep.subr.mxu0 0.0
        %2404 = vmatpush1.msra.mxu0 0.0
        %2405 = vmatprep.subr.mxu0 0.0
        %2406 = vmatpush1.msra.mxu0 0.0
        %2407 = vmatprep.subr.mxu0 0.0
        %2408 = vmatpush1.msra.mxu0 0.0
        %2409 = vmatprep.subr.mxu0 0.0
        %2410 = vmatpush1.msra.mxu0 0.0
        %2411 = vmatprep.subr.mxu0 0.0
        %2412 = vmatpush1.msra.mxu0 0.0
        %2413 = vmatprep.subr.mxu0 0.0
        %2414 = vmatpush1.msra.mxu0 0.0
        %2415 = vmatprep.subr.mxu0 0.0
        %2416 = vmatpush1.msra.mxu0 0.0
        %2417 = vmatprep.subr.mxu0 0.0
        %2418 = vmatpush1.msra.mxu0 0.0
        %2419 = vmatprep.subr.mxu0 0.0
        %2420 = vmatpush1.msra.mxu0 0.0
        %2421 = vmatprep.subr.mxu0 0.0
        %2422 = vmatpush1.msra.mxu0 0.0
        %2423 = vmatprep.subr.mxu0 0.0
        %2424 = vmatpush1.msra.mxu0 0.0
        %2425 = vmatprep.subr.mxu0 0.0
        %2426 = vmatpush1.msra.mxu0 0.0
        %2427 = vmatprep.subr.mxu0 0.0
        %2428 = vmatpush1.msra.mxu0 0.0
        %2429 = vmatprep.subr.mxu0 0.0
        %2430 = vmatpush1.msra.mxu0 0.0
        %2431 = vmatprep.subr.mxu0 0.0
        %2432 = vmatpush1.msra.mxu0 0.0
        %2433 = vmatprep.subr.mxu0 0.0
        %2434 = vmatpush1.msra.mxu0 0.0
        %2435 = vmatprep.subr.mxu0 0.0
        %2436 = vmatpush1.msra.mxu0 0.0
        %2437 = vmatprep.subr.mxu0 0.0
        %2438 = vmatpush1.msra.mxu0 0.0
        %2439 = vmatprep.subr.mxu0 0.0
        %2440 = vmatpush1.msra.mxu0 0.0
        %2441 = vmatprep.subr.mxu0 0.0
        %2442 = vmatpush1.msra.mxu0 0.0
        %2443 = vmatprep.subr.mxu0 0.0
        %2444 = vmatpush1.msra.mxu0 0.0
        %2445 = vmatprep.subr.mxu0 0.0
        %2446 = vmatpush1.msra.mxu0 0.0
        %2447 = vmatprep.subr.mxu0 0.0
        %2448 = vmatpush1.msra.mxu0 0.0
        %2449 = vmatprep.subr.mxu0 0.0
        %2450 = vmatpush1.msra.mxu0 0.0
        %2451 = vmatprep.subr.mxu0 0.0
        %2452 = vmatpush1.msra.mxu0 0.0
        %2453 = vmatprep.mubr.f32.mxu0 0.0
        %v2454 = vand.u32 %v183, 4294901760
        %v2455 = vsub.f32 %v183, %v2454
        %v2456 = vand.u32 %v2455, 4294901760
        %2457 = vmatmul.mubr.f32.gmra.mrb[0].mxu0 %v2456
        %v2458 = vpop.f32.mrb[0].mxu0
        %v2459 = vadd.f32 %v2361, %v2458
        %v2460 = vpop.f32.mrb[0].mxu0
        %2461 = vmatprep.mubr.f32.mxu0 0.0
        %v2462 = vand.u32 %v186, 4294901760
        %v2463 = vsub.f32 %v186, %v2462
        %v2464 = vand.u32 %v2463, 4294901760
        %2465 = vmatmul.mubr.f32.gmra.mrb[0].mxu0 %v2464
        %v2466 = vpop.f32.mrb[0].mxu0
        %v2467 = vadd.f32 %v2368, %v2466
        %v2468 = vpop.f32.mrb[0].mxu0
        %2469 = vmatprep.mubr.f32.mxu0 0.0
        %v2470 = vand.u32 %v189, 4294901760
        %v2471 = vsub.f32 %v189, %v2470
        %v2472 = vand.u32 %v2471, 4294901760
        %2473 = vmatmul.mubr.f32.gmra.mrb[0].mxu0 %v2472
        %v2474 = vpop.f32.mrb[0].mxu0
        %v2475 = vadd.f32 %v2375, %v2474
        %v2476 = vpop.f32.mrb[0].mxu0
        %2477 = vmatprep.mubr.f32.mxu0 0.0
        %v2478 = vand.u32 %v192, 4294901760
        %v2479 = vsub.f32 %v192, %v2478
        %v2480 = vand.u32 %v2479, 4294901760
        %2481 = vmatmul.mubr.f32.gmra.mrb[0].mxu0 %v2480
        %v2482 = vpop.f32.mrb[0].mxu0
        %v2483 = vadd.f32 %v2382, %v2482
        %v2484 = vpop.f32.mrb[0].mxu0
        %2485 = vdwg.mxu0
        %2486 = vmatprep.subr.mxu0 0.0
        %v2487 = vand.u32 %v2062, 4294901760
        %v2488 = vsub.f32 %v2062, %v2487
        %v2489 = vand.u32 %v2488, 4294901760
        %2490 = vmatpush1.msra.mxu0 %v2489
        %2491 = vmatprep.subr.mxu0 0.0
        %v2492 = vand.u32 %v2063, 4294901760
        %v2493 = vsub.f32 %v2063, %v2492
        %v2494 = vand.u32 %v2493, 4294901760
        %2495 = vmatpush1.msra.mxu0 %v2494
        %2496 = vmatprep.subr.mxu0 0.0
        %v2497 = vand.u32 %v2064, 4294901760
        %v2498 = vsub.f32 %v2064, %v2497
        %v2499 = vand.u32 %v2498, 4294901760
        %2500 = vmatpush1.msra.mxu0 %v2499
        %2501 = vmatprep.subr.mxu0 0.0
        %v2502 = vand.u32 %v2065, 4294901760
        %v2503 = vsub.f32 %v2065, %v2502
        %v2504 = vand.u32 %v2503, 4294901760
        %2505 = vmatpush1.msra.mxu0 %v2504
        %2506 = vmatprep.subr.mxu0 0.0
        %2507 = vmatpush1.msra.mxu0 0.0
        %2508 = vmatprep.subr.mxu0 0.0
        %2509 = vmatpush1.msra.mxu0 0.0
        %2510 = vmatprep.subr.mxu0 0.0
        %2511 = vmatpush1.msra.mxu0 0.0
        %2512 = vmatprep.subr.mxu0 0.0
        %2513 = vmatpush1.msra.mxu0 0.0
        %2514 = vmatprep.subr.mxu0 0.0
        %2515 = vmatpush1.msra.mxu0 0.0
        %2516 = vmatprep.subr.mxu0 0.0
        %2517 = vmatpush1.msra.mxu0 0.0
        %2518 = vmatprep.subr.mxu0 0.0
        %2519 = vmatpush1.msra.mxu0 0.0
        %2520 = vmatprep.subr.mxu0 0.0
        %2521 = vmatpush1.msra.mxu0 0.0
        %2522 = vmatprep.subr.mxu0 0.0
        %2523 = vmatpush1.msra.mxu0 0.0
        %2524 = vmatprep.subr.mxu0 0.0
        %2525 = vmatpush1.msra.mxu0 0.0
        %2526 = vmatprep.subr.mxu0 0.0
        %2527 = vmatpush1.msra.mxu0 0.0
        %2528 = vmatprep.subr.mxu0 0.0
        %2529 = vmatpush1.msra.mxu0 0.0
        %2530 = vmatprep.subr.mxu0 0.0
        %2531 = vmatpush1.msra.mxu0 0.0
        %2532 = vmatprep.subr.mxu0 0.0
        %2533 = vmatpush1.msra.mxu0 0.0
        %2534 = vmatprep.subr.mxu0 0.0
        %2535 = vmatpush1.msra.mxu0 0.0
        %2536 = vmatprep.subr.mxu0 0.0
        %2537 = vmatpush1.msra.mxu0 0.0
        %2538 = vmatprep.subr.mxu0 0.0
        %2539 = vmatpush1.msra.mxu0 0.0
        %2540 = vmatprep.subr.mxu0 0.0
        %2541 = vmatpush1.msra.mxu0 0.0
        %2542 = vmatprep.subr.mxu0 0.0
        %2543 = vmatpush1.msra.mxu0 0.0
        %2544 = vmatprep.subr.mxu0 0.0
        %2545 = vmatpush1.msra.mxu0 0.0
        %2546 = vmatprep.subr.mxu0 0.0
        %2547 = vmatpush1.msra.mxu0 0.0
        %2548 = vmatprep.subr.mxu0 0.0
        %2549 = vmatpush1.msra.mxu0 0.0
        %2550 = vmatprep.subr.mxu0 0.0
        %2551 = vmatpush1.msra.mxu0 0.0
        %2552 = vmatprep.subr.mxu0 0.0
        %2553 = vmatpush1.msra.mxu0 0.0
        %2554 = vmatprep.subr.mxu0 0.0
        %2555 = vmatpush1.msra.mxu0 0.0
        %2556 = vmatprep.subr.mxu0 0.0
        %2557 = vmatpush1.msra.mxu0 0.0
        %2558 = vmatprep.subr.mxu0 0.0
        %2559 = vmatpush1.msra.mxu0 0.0
        %2560 = vmatprep.subr.mxu0 0.0
        %2561 = vmatpush1.msra.mxu0 0.0
        %2562 = vmatprep.mubr.f32.mxu0 0.0
        %v2563 = vand.u32 %v183, 4294901760
        %2564 = vmatmul.mubr.f32.gmra.mrb[0].mxu0 %v2563
        %v2565 = vpop.f32.mrb[0].mxu0
        %v2566 = vadd.f32 %v2459, %v2565
        %v2567 = vpop.f32.mrb[0].mxu0
        %2568 = vmatprep.mubr.f32.mxu0 0.0
        %v2569 = vand.u32 %v186, 4294901760
        %2570 = vmatmul.mubr.f32.gmra.mrb[0].mxu0 %v2569
        %v2571 = vpop.f32.mrb[0].mxu0
        %v2572 = vadd.f32 %v2467, %v2571
        %v2573 = vpop.f32.mrb[0].mxu0
        %2574 = vmatprep.mubr.f32.mxu0 0.0
        %v2575 = vand.u32 %v189, 4294901760
        %2576 = vmatmul.mubr.f32.gmra.mrb[0].mxu0 %v2575
        %v2577 = vpop.f32.mrb[0].mxu0
        %v2578 = vadd.f32 %v2475, %v2577
        %v2579 = vpop.f32.mrb[0].mxu0
        %2580 = vmatprep.mubr.f32.mxu0 0.0
        %v2581 = vand.u32 %v192, 4294901760
        %2582 = vmatmul.mubr.f32.gmra.mrb[0].mxu0 %v2581
        %v2583 = vpop.f32.mrb[0].mxu0
        %v2584 = vadd.f32 %v2483, %v2583
        %v2585 = vpop.f32.mrb[0].mxu0
        %2586 = vdwg.mxu0
        %2587 = vmatprep.subr.mxu0 0.0
        %v2588 = vand.u32 %v2062, 4294901760
        %2589 = vmatpush1.msra.mxu0 %v2588
        %2590 = vmatprep.subr.mxu0 0.0
        %v2591 = vand.u32 %v2063, 4294901760
        %2592 = vmatpush1.msra.mxu0 %v2591
        %2593 = vmatprep.subr.mxu0 0.0
        %v2594 = vand.u32 %v2064, 4294901760
        %2595 = vmatpush1.msra.mxu0 %v2594
        %2596 = vmatprep.subr.mxu0 0.0
        %v2597 = vand.u32 %v2065, 4294901760
        %2598 = vmatpush1.msra.mxu0 %v2597
        %2599 = vmatprep.subr.mxu0 0.0
        %2600 = vmatpush1.msra.mxu0 0.0
        %2601 = vmatprep.subr.mxu0 0.0
        %2602 = vmatpush1.msra.mxu0 0.0
        %2603 = vmatprep.subr.mxu0 0.0
        %2604 = vmatpush1.msra.mxu0 0.0
        %2605 = vmatprep.subr.mxu0 0.0
        %2606 = vmatpush1.msra.mxu0 0.0
        %2607 = vmatprep.subr.mxu0 0.0
        %2608 = vmatpush1.msra.mxu0 0.0
        %2609 = vmatprep.subr.mxu0 0.0
        %2610 = vmatpush1.msra.mxu0 0.0
        %2611 = vmatprep.subr.mxu0 0.0
        %2612 = vmatpush1.msra.mxu0 0.0
        %2613 = vmatprep.subr.mxu0 0.0
        %2614 = vmatpush1.msra.mxu0 0.0
        %2615 = vmatprep.subr.mxu0 0.0
        %2616 = vmatpush1.msra.mxu0 0.0
        %2617 = vmatprep.subr.mxu0 0.0
        %2618 = vmatpush1.msra.mxu0 0.0
        %2619 = vmatprep.subr.mxu0 0.0
        %2620 = vmatpush1.msra.mxu0 0.0
        %2621 = vmatprep.subr.mxu0 0.0
        %2622 = vmatpush1.msra.mxu0 0.0
        %2623 = vmatprep.subr.mxu0 0.0
        %2624 = vmatpush1.msra.mxu0 0.0
        %2625 = vmatprep.subr.mxu0 0.0
        %2626 = vmatpush1.msra.mxu0 0.0
        %2627 = vmatprep.subr.mxu0 0.0
        %2628 = vmatpush1.msra.mxu0 0.0
        %2629 = vmatprep.subr.mxu0 0.0
        %2630 = vmatpush1.msra.mxu0 0.0
        %2631 = vmatprep.subr.mxu0 0.0
        %2632 = vmatpush1.msra.mxu0 0.0
        %2633 = vmatprep.subr.mxu0 0.0
        %2634 = vmatpush1.msra.mxu0 0.0
        %2635 = vmatprep.subr.mxu0 0.0
        %2636 = vmatpush1.msra.mxu0 0.0
        %2637 = vmatprep.subr.mxu0 0.0
        %2638 = vmatpush1.msra.mxu0 0.0
        %2639 = vmatprep.subr.mxu0 0.0
        %2640 = vmatpush1.msra.mxu0 0.0
        %2641 = vmatprep.subr.mxu0 0.0
        %2642 = vmatpush1.msra.mxu0 0.0
        %2643 = vmatprep.subr.mxu0 0.0
        %2644 = vmatpush1.msra.mxu0 0.0
        %2645 = vmatprep.subr.mxu0 0.0
        %2646 = vmatpush1.msra.mxu0 0.0
        %2647 = vmatprep.subr.mxu0 0.0
        %2648 = vmatpush1.msra.mxu0 0.0
        %2649 = vmatprep.subr.mxu0 0.0
        %2650 = vmatpush1.msra.mxu0 0.0
        %2651 = vmatprep.subr.mxu0 0.0
        %2652 = vmatpush1.msra.mxu0 0.0
        %2653 = vmatprep.subr.mxu0 0.0
        %2654 = vmatpush1.msra.mxu0 0.0
        %2655 = vmatprep.mubr.f32.mxu0 0.0
        %v2656 = vand.u32 %v183, 4294901760
        %2657 = vmatmul.mubr.f32.gmra.mrb[0].mxu0 %v2656
        %v2658 = vpop.f32.mrb[0].mxu0
        %v2659 = vadd.f32 %v2566, %v2658
        %v2660 = vpop.f32.mrb[0].mxu0
        %2661 = vmatprep.mubr.f32.mxu0 0.0
        %v2662 = vand.u32 %v186, 4294901760
        %2663 = vmatmul.mubr.f32.gmra.mrb[0].mxu0 %v2662
        %v2664 = vpop.f32.mrb[0].mxu0
        %v2665 = vadd.f32 %v2572, %v2664
        %v2666 = vpop.f32.mrb[0].mxu0
        %2667 = vmatprep.mubr.f32.mxu0 0.0
        %v2668 = vand.u32 %v189, 4294901760
        %2669 = vmatmul.mubr.f32.gmra.mrb[0].mxu0 %v2668
        %v2670 = vpop.f32.mrb[0].mxu0
        %v2671 = vadd.f32 %v2578, %v2670
        %v2672 = vpop.f32.mrb[0].mxu0
        %2673 = vmatprep.mubr.f32.mxu0 0.0
        %v2674 = vand.u32 %v192, 4294901760
        %2675 = vmatmul.mubr.f32.gmra.mrb[0].mxu0 %v2674
        %v2676 = vpop.f32.mrb[0].mxu0
        %v2677 = vadd.f32 %v2584, %v2676
        %v2678 = vpop.f32.mrb[0].mxu0
        %2679 = vdwg.mxu0
        %s2680 = scalar_lea.vmem %s161, 96 [#allocation2]
        %2681 = vst.msk [vmem:[%s2680] sm:$0xff] %vm808, %v2659
        %2682 = vst.msk [vmem:[%s2680 + $0x8] sm:$0xff] %vm808, %v2665
        %2683 = vst.msk [vmem:[%s2680 + $0x10] sm:$0xff] %vm808, %v2671
        %2684 = vst.msk [vmem:[%s2680 + $0x18] sm:$0xff] %vm808, %v2677
        %s2685 = sand.u32 %s87, 1
        %s2686 = scalar_lea.sflag [#allocation3], %s2685
        %s2687 = sand.u32 %s87, 1
        %s2688 = smul.addr %s2687, 128
        %s2689 = scalar_lea.vmem [#allocation2], %s2688
        // Predicated region
        $region29: #{tpu_custom_call.1} parent=27 // pred_check
          %p2690 = pneg %p97
        $region30: #{tpu_custom_call.1} parent=27 // pred_check_branch
          %2692 = sbr.rel (%p2690) target = $region32
        $region31: #{tpu_custom_call.1} parent=27 // pred_region
          %s2693 = smul.u32 4, %s21
          %s2695 = ssub.s32 2048, 2048
          %2696 = vsyncadd %s2686, %s2695
          %s2697 = smul.addr %s20, 16
          %s2698 = sadd.s32 %s2693, %s2697
          %s2699 = smul.addr %s2698, 128
          %s2700 = scalar_lea.hbm %s2, %s2699
          %s2701 = sshll.u32 %s2689, 4
          %s2702 = int_to_ptr.vmem [resolvable:$true] %s2701
          %2707 = dma.vmem_to_hbm [thread:$0]  %s2702, 2048, %s2700, %s2686, 128, 128, 8
        $region32: #{tpu_custom_call.1} parent=27 // pred_fallthru
          _
      $region28: #{tpu_custom_call.1} parent=5 // pred_fallthru
        _
      %p2708 = scmp.le.s32.totalorder 2, %s11
      // Predicated region
      $region33: #{tpu_custom_call.1} parent=5 // pred_check
        %p2709 = pneg %p2708
      $region34: #{tpu_custom_call.1} parent=5 // pred_check_branch
        %2711 = sbr.rel (%p2709) target = $region36
      $region35: #{tpu_custom_call.1} parent=5 // pred_region
        %s2712 = ssub.s32 %s11, 2
        // Predicated region
        $region37: #{tpu_custom_call.1} parent=35 // pred_check
          %p2713 = pneg %p103
        $region38: #{tpu_custom_call.1} parent=35 // pred_check_branch
          %2715 = sbr.rel (%p2713) target = $region40
        $region39: #{tpu_custom_call.1} parent=35 // pred_region
          %s2716 = sand.u32 %s88, 1
          %s2717 = scalar_lea.sflag [#allocation3], %s2716
          %s2718 = sand.u32 %s88, 1
          %s2719 = smul.addr %s2718, 128
          %s2720 = scalar_lea.vmem [#allocation2], %s2719
          %2721 = dma.done %s2717, 2048
        $region40: #{tpu_custom_call.1} parent=35 // pred_fallthru
          _
      $region36: #{tpu_custom_call.1} parent=5 // pred_fallthru
        _
    $region6: #{tpu_custom_call.1} parent=1 // loop_footer
      %s15 = sadd.s32 1, %s11
    $region7: #{tpu_custom_call.1} parent=1 // loop_footer_branch
      %10 = sbr.rel target = $region3
    $region8: #{tpu_custom_call.1} parent=1 // loop_exit
      _
    %2722 = vsyncpa [#allocation3], 1
    %s2723 = scalar_lea.sflag [#allocation3], 1
    %2724 = vsyncpa %s2723, 1

</llo_original>
